<compile_context>
chip_gen: v5e
topology: v5e:2x2
jax: 0.10.0
libtpu: 0.0.40
codegen_flags: <defaults>
</compile_context>

<pallas_src>
import functools

import jax
import jax.numpy as jnp
from jax.experimental import pallas as pl
from jax.experimental.pallas import tpu as pltpu


def _lstm_block_kernel(ids_ref,      # (B,)  int32, SMEM (scalar prefetch)
                       hin_ref,      # (TB, 2H)   compute dtype, VMEM
                       u_ref,        # (TB, H)    f32 uniforms for dropout, VMEM
                       emb_ref,      # (V, H)     compute dtype, HBM (pl.ANY)
                       wih_ref,      # (H, 4*Hp)  compute dtype, VMEM
                       whx_ref,      # (2H, 4*Hp) compute dtype, VMEM
                       wd_ref,       # (2H, Hp)   compute dtype, VMEM
                       out_ref,      # (TB, Hp)   f32, VMEM
                       x_buf,        # (TB, H)    compute dtype, VMEM scratch
                       dma_sems,     # (TB,)      DMA semaphores
                       *, hp, n_drop, is_training, batch_tile):
    tb = batch_tile
    b0 = pl.program_id(0) * tb

    # ---- embedding gather: DMA one row per batch element straight from HBM ----
    copies = []
    for i in range(tb):
        row = ids_ref[b0 + i]
        cp = pltpu.make_async_copy(emb_ref.at[pl.ds(row, 1)],   # (1, H) HBM view
                                   x_buf.at[pl.ds(i, 1)],       # (1, H) VMEM view
                                   dma_sems.at[i])
        cp.start()
        copies.append(cp)
    for cp in copies:
        cp.wait()

    x = x_buf[...].astype(jnp.float32)                          # (TB, H)

    # ---- dropout (inverted dropout, same semantics as F.dropout in training mode) ----
    if is_training and n_drop > 0.0:
        keep = u_ref[...] >= jnp.float32(n_drop)                # P(drop) == n_drop
        x = jnp.where(keep, x * jnp.float32(1.0 / (1.0 - n_drop)), 0.0)

    x_c = x.astype(wih_ref.dtype)                               # bf16/f32 for the MXU
    hin = hin_ref[...]                                          # (TB, 2H)

    # ---- ht = ct = dense(hidden_states[:, -2])  (padded columns are zero) ----
    ht = jnp.dot(hin, wd_ref[...], preferred_element_type=jnp.float32)      # (TB, Hp)

    # ---- LSTMCell gates, PyTorch order [i | f | g | o], fused hidden path:
    #      h_in @ (W_dense^T @ W_hh^T)  ==  (h_in @ W_dense^T) @ W_hh^T
    gates = (jnp.dot(x_c, wih_ref[...], preferred_element_type=jnp.float32)
             + jnp.dot(hin, whx_ref[...], preferred_element_type=jnp.float32))  # (TB, 4Hp)

    i_g = jax.nn.sigmoid(gates[:, 0 * hp:1 * hp])
    f_g = jax.nn.sigmoid(gates[:, 1 * hp:2 * hp])
    g_g = jnp.tanh(gates[:, 2 * hp:3 * hp])
    o_g = jax.nn.sigmoid(gates[:, 3 * hp:4 * hp])

    c_new = f_g * ht + i_g * g_g           # ct == ht; padded cols stay exactly 0
    out_ref[...] = o_g * jnp.tanh(c_new)   # lane-dense (TB, Hp) store


def prepare_lstm_block_params(emb, w_dense, w_ih, w_hh, *, weight_dtype=jnp.bfloat16):
    """One-time weight preparation (cache the result; do NOT redo per forward call).

    emb:      (V, H)      PyTorch Embedding.weight     (row 0 must be zero: padding_idx=0)
    w_dense:  (H, 2H)     PyTorch Linear.weight        (out, in)
    w_ih/hh:  (4H, H)     PyTorch LSTMCell.weight_*    gate order [i | f | g | o]
    """
    V, H = emb.shape
    assert w_dense.shape == (H, 2 * H)
    assert w_ih.shape == (4 * H, H) and w_hh.shape == (4 * H, H)
    hp = 128 * ((H + 127) // 128)          # pad gate / output axis to a lane-dense width

    def pad_gates(w_t):                    # (K, 4H) -> (K, 4*Hp), zero-pad each gate block
        k = w_t.shape[0]
        wg = w_t.reshape(k, 4, H)
        wg = jnp.pad(wg, ((0, 0), (0, 0), (0, hp - H)))
        return wg.reshape(k, 4 * hp)

    w_d_t = jnp.transpose(w_dense).astype(jnp.float32)          # (2H, H)
    w_ih_t = jnp.transpose(w_ih).astype(jnp.float32)            # (H, 4H)
    w_hh_t = jnp.transpose(w_hh).astype(jnp.float32)            # (H, 4H)
    w_hx_t = w_d_t @ w_hh_t                                     # (2H, 4H) fused hidden path

    return dict(
        emb=emb.astype(weight_dtype),                                        # (V, H)  HBM
        w_dense_t=jnp.pad(w_d_t, ((0, 0), (0, hp - H))).astype(weight_dtype),  # (2H, Hp)
        w_ih_t=pad_gates(w_ih_t).astype(weight_dtype),                        # (H, 4Hp)
        w_hx_t=pad_gates(w_hx_t).astype(weight_dtype),                        # (2H, 4Hp)
        hidden=H, hidden_padded=hp, dtype=weight_dtype,
    )


def lstm_block_forward(input_ids, hidden_states, params, *,
                       n_drop=0.05, is_training=True, dropout_key=None, batch_tile=None):
    """input_ids: (B, S) int; hidden_states: (B, T, 2H) f32; params from prepare_lstm_block_params."""
    B, _ = input_ids.shape
    H, hp = params["hidden"], params["hidden_padded"]
    wdt = params["dtype"]
    tb = B if batch_tile is None else batch_tile
    assert B % tb == 0, "batch_tile must divide batch"
    grid = (B // tb,)

    # slice at the HBM boundary: only what the forward pass actually reads
    last_ids = input_ids[:, -1].astype(jnp.int32)               # (B,)
    h_in = hidden_states[:, -2, :].astype(wdt)                  # (B, 2H)

    if is_training and n_drop > 0.0:
        if dropout_key is None:
            dropout_key = jax.random.PRNGKey(0)
        u = jax.random.uniform(dropout_key, (B, H), jnp.float32)
    else:
        u = jnp.zeros((B, H), jnp.float32)                      # unused in eval mode

    kernel = functools.partial(_lstm_block_kernel, hp=hp, n_drop=float(n_drop),
                               is_training=bool(is_training), batch_tile=tb)

    out_padded = pl.pallas_call(
        kernel,
        out_shape=jax.ShapeDtypeStruct((B, hp), jnp.float32),
        grid_spec=pltpu.PrefetchScalarGridSpec(
            num_scalar_prefetch=1,                               # last_ids -> SMEM
            grid=grid,
            in_specs=[
                pl.BlockSpec((tb, 2 * H), lambda b, ids: (b, 0)),        # hidden slab tile
                pl.BlockSpec((tb, H), lambda b, ids: (b, 0)),            # dropout uniforms
                pl.BlockSpec(memory_space=pl.ANY),                       # embedding table (HBM)
                pl.BlockSpec((H, 4 * hp), lambda b, ids: (0, 0)),        # W_ih^T (padded)
                pl.BlockSpec((2 * H, 4 * hp), lambda b, ids: (0, 0)),    # W_hx   (fused, padded)
                pl.BlockSpec((2 * H, hp), lambda b, ids: (0, 0)),        # W_dense^T (padded)
            ],
            out_specs=pl.BlockSpec((tb, hp), lambda b, ids: (b, 0)),
            scratch_shapes=[
                pltpu.VMEM((tb, H), wdt),                # gathered embedding rows
                pltpu.SemaphoreType.DMA((tb,)),          # one sem per row DMA
            ],
        ),
        compiler_params=pltpu.CompilerParams(
            dimension_semantics=("parallel",),           # batch tiles shard across TCs (v7x)
            vmem_limit_bytes=32 * 1024 * 1024,
        ),
    )(last_ids, h_in, u, params["emb"], params["w_ih_t"], params["w_hx_t"], params["w_dense_t"])

    return out_padded[:, :H]                             # drop lane padding in the wrapper


def _ref_forward_eval(input_ids, hidden_states, emb, w_dense, w_ih, w_hh):
    """Pure-JAX PyTorch-equivalent reference (dropout disabled)."""
    H = emb.shape[1]
    x = emb[input_ids[:, -1]]
    ht = hidden_states[:, -2] @ w_dense.T
    ct = ht
    gates = x @ w_ih.T + ht @ w_hh.T
    i = jax.nn.sigmoid(gates[:, :H])
    f = jax.nn.sigmoid(gates[:, H:2 * H])
    g = jnp.tanh(gates[:, 2 * H:3 * H])
    o = jax.nn.sigmoid(gates[:, 3 * H:])
    c = f * ct + i * g
    return o * jnp.tanh(c)


if __name__ == "__main__":
    # small, LSTMBlock-consistent shapes
    VOCAB, HIDDEN = 64, 32
    BATCH, SEQ, T = 8, 8, 4

    key = jax.random.PRNGKey(0)
    k_emb, k_wd, k_wih, k_whh, k_ids, k_hs, k_drop = jax.random.split(key, 7)

    # deterministic "parameters" (PyTorch layouts)
    emb = jax.random.normal(k_emb, (VOCAB, HIDDEN), jnp.float32) * 0.1
    emb = emb.at[0].set(0.0)                                   # padding_idx=0 -> row 0 is zero
    w_dense = jax.random.normal(k_wd, (HIDDEN, 2 * HIDDEN), jnp.float32) * 0.1
    w_ih = jax.random.normal(k_wih, (4 * HIDDEN, HIDDEN), jnp.float32) * 0.1
    w_hh = jax.random.normal(k_whh, (4 * HIDDEN, HIDDEN), jnp.float32) * 0.1

    # inputs
    input_ids = jax.random.randint(k_ids, (BATCH, SEQ), 0, VOCAB, jnp.int32)
    hidden_states = jax.random.normal(k_hs, (BATCH, T, 2 * HIDDEN), jnp.float32)

    # --- eval mode, f32 weights: exact semantic check against the PyTorch-equivalent ref ---
    params_f32 = prepare_lstm_block_params(emb, w_dense, w_ih, w_hh, weight_dtype=jnp.float32)
    out_eval = lstm_block_forward(input_ids, hidden_states, params_f32,
                                  n_drop=0.05, is_training=False)
    jax.block_until_ready(out_eval)
    ref = _ref_forward_eval(input_ids, hidden_states, emb, w_dense, w_ih, w_hh)
    assert out_eval.shape == (BATCH, HIDDEN)
    assert jnp.allclose(out_eval, ref, atol=2e-3, rtol=2e-3), "mismatch vs reference"

    # --- training mode, bf16 weights (bandwidth-optimized path), dropout active ---
    params_bf16 = prepare_lstm_block_params(emb, w_dense, w_ih, w_hh, weight_dtype=jnp.bfloat16)
    out_train = lstm_block_forward(input_ids, hidden_states, params_bf16,
                                   n_drop=0.05, is_training=True, dropout_key=k_drop)
    jax.block_until_ready(out_train)
    assert out_train.shape == (BATCH, HIDDEN)
    assert bool(jnp.all(jnp.isfinite(out_train)))

    print("KERNEL_OK")
</pallas_src>

<mosaic_0001>
module attributes {stable_mosaic.version = 11 : i64} {
  func.func @_lstm_block_kernel(%arg0: i32, %arg1: memref<8xi32, #tpu.memory_space<smem>>, %arg2: memref<8x64xf32, #tpu.memory_space<vmem>>, %arg3: memref<8x32xf32, #tpu.memory_space<vmem>>, %arg4: memref<64x32xf32, #tpu.memory_space<any>>, %arg5: memref<32x512xf32, #tpu.memory_space<vmem>>, %arg6: memref<64x512xf32, #tpu.memory_space<vmem>>, %arg7: memref<64x128xf32, #tpu.memory_space<vmem>>, %arg8: memref<8x128xf32, #tpu.memory_space<vmem>>, %arg9: memref<8x32xf32, #tpu.memory_space<vmem>>, %arg10: memref<8x!tpu.dma_semaphore, #tpu.memory_space<semaphore_mem>>) attributes {dimension_semantics = [#tpu.dimension_semantics<parallel>], iteration_bounds = array<i64: 1>, scalar_prefetch = 1 : i64, scratch_operands = 2 : i64, tpu.core_type = #tpu.core_type<tc>, window_params = [{transform_indices = @transform_0, window_bounds = array<i64: 8, 64>}, {transform_indices = @transform_1, window_bounds = array<i64: 8, 32>}, {}, {pipeline_mode = #tpu.pipeline_mode<synchronous>, transform_indices = @transform_3, window_bounds = array<i64: 32, 512>}, {pipeline_mode = #tpu.pipeline_mode<synchronous>, transform_indices = @transform_4, window_bounds = array<i64: 64, 512>}, {pipeline_mode = #tpu.pipeline_mode<synchronous>, transform_indices = @transform_5, window_bounds = array<i64: 64, 128>}, {transform_indices = @transform_6, window_bounds = array<i64: 8, 128>}]} {
    %c8_i32 = arith.constant 8 : i32
    %0 = arith.muli %arg0, %c8_i32 : i32
    %c0_i32 = arith.constant 0 : i32
    %1 = arith.addi %0, %c0_i32 : i32
    %2 = arith.index_cast %1 : i32 to index
    %3 = memref.load %arg1[%2] : memref<8xi32, #tpu.memory_space<smem>>
    %c0_i32_0 = arith.constant 0 : i32
    %c0_i32_1 = arith.constant 0 : i32
    %4 = tpu.memref_slice %arg4[%3, %c0_i32_1] : memref<64x32xf32, #tpu.memory_space<any>> -> memref<1x32xf32, #tpu.memory_space<any>>
    %c0_i32_2 = arith.constant 0 : i32
    %c0_i32_3 = arith.constant 0 : i32
    %5 = tpu.memref_slice %arg9[%c0_i32_2, %c0_i32_3] : memref<8x32xf32, #tpu.memory_space<vmem>> -> memref<1x32xf32, #tpu.memory_space<vmem>>
    %6 = tpu.memref_slice %arg10[%c0_i32_0] : memref<8x!tpu.dma_semaphore, #tpu.memory_space<semaphore_mem>> -> memref<1x!tpu.dma_semaphore, #tpu.memory_space<semaphore_mem>>
    %7 = tpu.memref_squeeze %6 : memref<1x!tpu.dma_semaphore, #tpu.memory_space<semaphore_mem>> -> memref<!tpu.dma_semaphore, #tpu.memory_space<semaphore_mem>>
    tpu.enqueue_dma source(%4 : memref<1x32xf32, #tpu.memory_space<any>>) target(%5 : memref<1x32xf32, #tpu.memory_space<vmem>>) target_semaphore(%7 : memref<!tpu.dma_semaphore, #tpu.memory_space<semaphore_mem>>)
    %c1_i32 = arith.constant 1 : i32
    %8 = arith.addi %0, %c1_i32 : i32
    %9 = arith.index_cast %8 : i32 to index
    %10 = memref.load %arg1[%9] : memref<8xi32, #tpu.memory_space<smem>>
    %c1_i32_4 = arith.constant 1 : i32
    %c0_i32_5 = arith.constant 0 : i32
    %11 = tpu.memref_slice %arg4[%10, %c0_i32_5] : memref<64x32xf32, #tpu.memory_space<any>> -> memref<1x32xf32, #tpu.memory_space<any>>
    %c1_i32_6 = arith.constant 1 : i32
    %c0_i32_7 = arith.constant 0 : i32
    %12 = tpu.memref_slice %arg9[%c1_i32_6, %c0_i32_7] : memref<8x32xf32, #tpu.memory_space<vmem>> -> memref<1x32xf32, #tpu.memory_space<vmem>>
    %13 = tpu.memref_slice %arg10[%c1_i32_4] : memref<8x!tpu.dma_semaphore, #tpu.memory_space<semaphore_mem>> -> memref<1x!tpu.dma_semaphore, #tpu.memory_space<semaphore_mem>>
    %14 = tpu.memref_squeeze %13 : memref<1x!tpu.dma_semaphore, #tpu.memory_space<semaphore_mem>> -> memref<!tpu.dma_semaphore, #tpu.memory_space<semaphore_mem>>
    tpu.enqueue_dma source(%11 : memref<1x32xf32, #tpu.memory_space<any>>) target(%12 : memref<1x32xf32, #tpu.memory_space<vmem>>) target_semaphore(%14 : memref<!tpu.dma_semaphore, #tpu.memory_space<semaphore_mem>>)
    %c2_i32 = arith.constant 2 : i32
    %15 = arith.addi %0, %c2_i32 : i32
    %16 = arith.index_cast %15 : i32 to index
    %17 = memref.load %arg1[%16] : memref<8xi32, #tpu.memory_space<smem>>
    %c2_i32_8 = arith.constant 2 : i32
    %c0_i32_9 = arith.constant 0 : i32
    %18 = tpu.memref_slice %arg4[%17, %c0_i32_9] : memref<64x32xf32, #tpu.memory_space<any>> -> memref<1x32xf32, #tpu.memory_space<any>>
    %c2_i32_10 = arith.constant 2 : i32
    %c0_i32_11 = arith.constant 0 : i32
    %19 = tpu.memref_slice %arg9[%c2_i32_10, %c0_i32_11] : memref<8x32xf32, #tpu.memory_space<vmem>> -> memref<1x32xf32, #tpu.memory_space<vmem>>
    %20 = tpu.memref_slice %arg10[%c2_i32_8] : memref<8x!tpu.dma_semaphore, #tpu.memory_space<semaphore_mem>> -> memref<1x!tpu.dma_semaphore, #tpu.memory_space<semaphore_mem>>
    %21 = tpu.memref_squeeze %20 : memref<1x!tpu.dma_semaphore, #tpu.memory_space<semaphore_mem>> -> memref<!tpu.dma_semaphore, #tpu.memory_space<semaphore_mem>>
    tpu.enqueue_dma source(%18 : memref<1x32xf32, #tpu.memory_space<any>>) target(%19 : memref<1x32xf32, #tpu.memory_space<vmem>>) target_semaphore(%21 : memref<!tpu.dma_semaphore, #tpu.memory_space<semaphore_mem>>)
    %c3_i32 = arith.constant 3 : i32
    %22 = arith.addi %0, %c3_i32 : i32
    %23 = arith.index_cast %22 : i32 to index
    %24 = memref.load %arg1[%23] : memref<8xi32, #tpu.memory_space<smem>>
    %c3_i32_12 = arith.constant 3 : i32
    %c0_i32_13 = arith.constant 0 : i32
    %25 = tpu.memref_slice %arg4[%24, %c0_i32_13] : memref<64x32xf32, #tpu.memory_space<any>> -> memref<1x32xf32, #tpu.memory_space<any>>
    %c3_i32_14 = arith.constant 3 : i32
    %c0_i32_15 = arith.constant 0 : i32
    %26 = tpu.memref_slice %arg9[%c3_i32_14, %c0_i32_15] : memref<8x32xf32, #tpu.memory_space<vmem>> -> memref<1x32xf32, #tpu.memory_space<vmem>>
    %27 = tpu.memref_slice %arg10[%c3_i32_12] : memref<8x!tpu.dma_semaphore, #tpu.memory_space<semaphore_mem>> -> memref<1x!tpu.dma_semaphore, #tpu.memory_space<semaphore_mem>>
    %28 = tpu.memref_squeeze %27 : memref<1x!tpu.dma_semaphore, #tpu.memory_space<semaphore_mem>> -> memref<!tpu.dma_semaphore, #tpu.memory_space<semaphore_mem>>
    tpu.enqueue_dma source(%25 : memref<1x32xf32, #tpu.memory_space<any>>) target(%26 : memref<1x32xf32, #tpu.memory_space<vmem>>) target_semaphore(%28 : memref<!tpu.dma_semaphore, #tpu.memory_space<semaphore_mem>>)
    %c4_i32 = arith.constant 4 : i32
    %29 = arith.addi %0, %c4_i32 : i32
    %30 = arith.index_cast %29 : i32 to index
    %31 = memref.load %arg1[%30] : memref<8xi32, #tpu.memory_space<smem>>
    %c4_i32_16 = arith.constant 4 : i32
    %c0_i32_17 = arith.constant 0 : i32
    %32 = tpu.memref_slice %arg4[%31, %c0_i32_17] : memref<64x32xf32, #tpu.memory_space<any>> -> memref<1x32xf32, #tpu.memory_space<any>>
    %c4_i32_18 = arith.constant 4 : i32
    %c0_i32_19 = arith.constant 0 : i32
    %33 = tpu.memref_slice %arg9[%c4_i32_18, %c0_i32_19] : memref<8x32xf32, #tpu.memory_space<vmem>> -> memref<1x32xf32, #tpu.memory_space<vmem>>
    %34 = tpu.memref_slice %arg10[%c4_i32_16] : memref<8x!tpu.dma_semaphore, #tpu.memory_space<semaphore_mem>> -> memref<1x!tpu.dma_semaphore, #tpu.memory_space<semaphore_mem>>
    %35 = tpu.memref_squeeze %34 : memref<1x!tpu.dma_semaphore, #tpu.memory_space<semaphore_mem>> -> memref<!tpu.dma_semaphore, #tpu.memory_space<semaphore_mem>>
    tpu.enqueue_dma source(%32 : memref<1x32xf32, #tpu.memory_space<any>>) target(%33 : memref<1x32xf32, #tpu.memory_space<vmem>>) target_semaphore(%35 : memref<!tpu.dma_semaphore, #tpu.memory_space<semaphore_mem>>)
    %c5_i32 = arith.constant 5 : i32
    %36 = arith.addi %0, %c5_i32 : i32
    %37 = arith.index_cast %36 : i32 to index
    %38 = memref.load %arg1[%37] : memref<8xi32, #tpu.memory_space<smem>>
    %c5_i32_20 = arith.constant 5 : i32
    %c0_i32_21 = arith.constant 0 : i32
    %39 = tpu.memref_slice %arg4[%38, %c0_i32_21] : memref<64x32xf32, #tpu.memory_space<any>> -> memref<1x32xf32, #tpu.memory_space<any>>
    %c5_i32_22 = arith.constant 5 : i32
    %c0_i32_23 = arith.constant 0 : i32
    %40 = tpu.memref_slice %arg9[%c5_i32_22, %c0_i32_23] : memref<8x32xf32, #tpu.memory_space<vmem>> -> memref<1x32xf32, #tpu.memory_space<vmem>>
    %41 = tpu.memref_slice %arg10[%c5_i32_20] : memref<8x!tpu.dma_semaphore, #tpu.memory_space<semaphore_mem>> -> memref<1x!tpu.dma_semaphore, #tpu.memory_space<semaphore_mem>>
    %42 = tpu.memref_squeeze %41 : memref<1x!tpu.dma_semaphore, #tpu.memory_space<semaphore_mem>> -> memref<!tpu.dma_semaphore, #tpu.memory_space<semaphore_mem>>
    tpu.enqueue_dma source(%39 : memref<1x32xf32, #tpu.memory_space<any>>) target(%40 : memref<1x32xf32, #tpu.memory_space<vmem>>) target_semaphore(%42 : memref<!tpu.dma_semaphore, #tpu.memory_space<semaphore_mem>>)
    %c6_i32 = arith.constant 6 : i32
    %43 = arith.addi %0, %c6_i32 : i32
    %44 = arith.index_cast %43 : i32 to index
    %45 = memref.load %arg1[%44] : memref<8xi32, #tpu.memory_space<smem>>
    %c6_i32_24 = arith.constant 6 : i32
    %c0_i32_25 = arith.constant 0 : i32
    %46 = tpu.memref_slice %arg4[%45, %c0_i32_25] : memref<64x32xf32, #tpu.memory_space<any>> -> memref<1x32xf32, #tpu.memory_space<any>>
    %c6_i32_26 = arith.constant 6 : i32
    %c0_i32_27 = arith.constant 0 : i32
    %47 = tpu.memref_slice %arg9[%c6_i32_26, %c0_i32_27] : memref<8x32xf32, #tpu.memory_space<vmem>> -> memref<1x32xf32, #tpu.memory_space<vmem>>
    %48 = tpu.memref_slice %arg10[%c6_i32_24] : memref<8x!tpu.dma_semaphore, #tpu.memory_space<semaphore_mem>> -> memref<1x!tpu.dma_semaphore, #tpu.memory_space<semaphore_mem>>
    %49 = tpu.memref_squeeze %48 : memref<1x!tpu.dma_semaphore, #tpu.memory_space<semaphore_mem>> -> memref<!tpu.dma_semaphore, #tpu.memory_space<semaphore_mem>>
    tpu.enqueue_dma source(%46 : memref<1x32xf32, #tpu.memory_space<any>>) target(%47 : memref<1x32xf32, #tpu.memory_space<vmem>>) target_semaphore(%49 : memref<!tpu.dma_semaphore, #tpu.memory_space<semaphore_mem>>)
    %c7_i32 = arith.constant 7 : i32
    %50 = arith.addi %0, %c7_i32 : i32
    %51 = arith.index_cast %50 : i32 to index
    %52 = memref.load %arg1[%51] : memref<8xi32, #tpu.memory_space<smem>>
    %c7_i32_28 = arith.constant 7 : i32
    %c0_i32_29 = arith.constant 0 : i32
    %53 = tpu.memref_slice %arg4[%52, %c0_i32_29] : memref<64x32xf32, #tpu.memory_space<any>> -> memref<1x32xf32, #tpu.memory_space<any>>
    %c7_i32_30 = arith.constant 7 : i32
    %c0_i32_31 = arith.constant 0 : i32
    %54 = tpu.memref_slice %arg9[%c7_i32_30, %c0_i32_31] : memref<8x32xf32, #tpu.memory_space<vmem>> -> memref<1x32xf32, #tpu.memory_space<vmem>>
    %55 = tpu.memref_slice %arg10[%c7_i32_28] : memref<8x!tpu.dma_semaphore, #tpu.memory_space<semaphore_mem>> -> memref<1x!tpu.dma_semaphore, #tpu.memory_space<semaphore_mem>>
    %56 = tpu.memref_squeeze %55 : memref<1x!tpu.dma_semaphore, #tpu.memory_space<semaphore_mem>> -> memref<!tpu.dma_semaphore, #tpu.memory_space<semaphore_mem>>
    tpu.enqueue_dma source(%53 : memref<1x32xf32, #tpu.memory_space<any>>) target(%54 : memref<1x32xf32, #tpu.memory_space<vmem>>) target_semaphore(%56 : memref<!tpu.dma_semaphore, #tpu.memory_space<semaphore_mem>>)
    %c0_i32_32 = arith.constant 0 : i32
    %c0_i32_33 = arith.constant 0 : i32
    %57 = tpu.memref_slice %arg4[%3, %c0_i32_33] : memref<64x32xf32, #tpu.memory_space<any>> -> memref<1x32xf32, #tpu.memory_space<any>>
    %c0_i32_34 = arith.constant 0 : i32
    %c0_i32_35 = arith.constant 0 : i32
    %58 = tpu.memref_slice %arg9[%c0_i32_34, %c0_i32_35] : memref<8x32xf32, #tpu.memory_space<vmem>> -> memref<1x32xf32, #tpu.memory_space<vmem>>
    %59 = tpu.memref_slice %arg10[%c0_i32_32] : memref<8x!tpu.dma_semaphore, #tpu.memory_space<semaphore_mem>> -> memref<1x!tpu.dma_semaphore, #tpu.memory_space<semaphore_mem>>
    %60 = tpu.memref_squeeze %59 : memref<1x!tpu.dma_semaphore, #tpu.memory_space<semaphore_mem>> -> memref<!tpu.dma_semaphore, #tpu.memory_space<semaphore_mem>>
    tpu.wait_dma2 semaphore(%60 : memref<!tpu.dma_semaphore, #tpu.memory_space<semaphore_mem>>) src(%57 : memref<1x32xf32, #tpu.memory_space<any>>) dst(%58 : memref<1x32xf32, #tpu.memory_space<vmem>>)
    %c1_i32_36 = arith.constant 1 : i32
    %c0_i32_37 = arith.constant 0 : i32
    %61 = tpu.memref_slice %arg4[%10, %c0_i32_37] : memref<64x32xf32, #tpu.memory_space<any>> -> memref<1x32xf32, #tpu.memory_space<any>>
    %c1_i32_38 = arith.constant 1 : i32
    %c0_i32_39 = arith.constant 0 : i32
    %62 = tpu.memref_slice %arg9[%c1_i32_38, %c0_i32_39] : memref<8x32xf32, #tpu.memory_space<vmem>> -> memref<1x32xf32, #tpu.memory_space<vmem>>
    %63 = tpu.memref_slice %arg10[%c1_i32_36] : memref<8x!tpu.dma_semaphore, #tpu.memory_space<semaphore_mem>> -> memref<1x!tpu.dma_semaphore, #tpu.memory_space<semaphore_mem>>
    %64 = tpu.memref_squeeze %63 : memref<1x!tpu.dma_semaphore, #tpu.memory_space<semaphore_mem>> -> memref<!tpu.dma_semaphore, #tpu.memory_space<semaphore_mem>>
    tpu.wait_dma2 semaphore(%64 : memref<!tpu.dma_semaphore, #tpu.memory_space<semaphore_mem>>) src(%61 : memref<1x32xf32, #tpu.memory_space<any>>) dst(%62 : memref<1x32xf32, #tpu.memory_space<vmem>>)
    %c2_i32_40 = arith.constant 2 : i32
    %c0_i32_41 = arith.constant 0 : i32
    %65 = tpu.memref_slice %arg4[%17, %c0_i32_41] : memref<64x32xf32, #tpu.memory_space<any>> -> memref<1x32xf32, #tpu.memory_space<any>>
    %c2_i32_42 = arith.constant 2 : i32
    %c0_i32_43 = arith.constant 0 : i32
    %66 = tpu.memref_slice %arg9[%c2_i32_42, %c0_i32_43] : memref<8x32xf32, #tpu.memory_space<vmem>> -> memref<1x32xf32, #tpu.memory_space<vmem>>
    %67 = tpu.memref_slice %arg10[%c2_i32_40] : memref<8x!tpu.dma_semaphore, #tpu.memory_space<semaphore_mem>> -> memref<1x!tpu.dma_semaphore, #tpu.memory_space<semaphore_mem>>
    %68 = tpu.memref_squeeze %67 : memref<1x!tpu.dma_semaphore, #tpu.memory_space<semaphore_mem>> -> memref<!tpu.dma_semaphore, #tpu.memory_space<semaphore_mem>>
    tpu.wait_dma2 semaphore(%68 : memref<!tpu.dma_semaphore, #tpu.memory_space<semaphore_mem>>) src(%65 : memref<1x32xf32, #tpu.memory_space<any>>) dst(%66 : memref<1x32xf32, #tpu.memory_space<vmem>>)
    %c3_i32_44 = arith.constant 3 : i32
    %c0_i32_45 = arith.constant 0 : i32
    %69 = tpu.memref_slice %arg4[%24, %c0_i32_45] : memref<64x32xf32, #tpu.memory_space<any>> -> memref<1x32xf32, #tpu.memory_space<any>>
    %c3_i32_46 = arith.constant 3 : i32
    %c0_i32_47 = arith.constant 0 : i32
    %70 = tpu.memref_slice %arg9[%c3_i32_46, %c0_i32_47] : memref<8x32xf32, #tpu.memory_space<vmem>> -> memref<1x32xf32, #tpu.memory_space<vmem>>
    %71 = tpu.memref_slice %arg10[%c3_i32_44] : memref<8x!tpu.dma_semaphore, #tpu.memory_space<semaphore_mem>> -> memref<1x!tpu.dma_semaphore, #tpu.memory_space<semaphore_mem>>
    %72 = tpu.memref_squeeze %71 : memref<1x!tpu.dma_semaphore, #tpu.memory_space<semaphore_mem>> -> memref<!tpu.dma_semaphore, #tpu.memory_space<semaphore_mem>>
    tpu.wait_dma2 semaphore(%72 : memref<!tpu.dma_semaphore, #tpu.memory_space<semaphore_mem>>) src(%69 : memref<1x32xf32, #tpu.memory_space<any>>) dst(%70 : memref<1x32xf32, #tpu.memory_space<vmem>>)
    %c4_i32_48 = arith.constant 4 : i32
    %c0_i32_49 = arith.constant 0 : i32
    %73 = tpu.memref_slice %arg4[%31, %c0_i32_49] : memref<64x32xf32, #tpu.memory_space<any>> -> memref<1x32xf32, #tpu.memory_space<any>>
    %c4_i32_50 = arith.constant 4 : i32
    %c0_i32_51 = arith.constant 0 : i32
    %74 = tpu.memref_slice %arg9[%c4_i32_50, %c0_i32_51] : memref<8x32xf32, #tpu.memory_space<vmem>> -> memref<1x32xf32, #tpu.memory_space<vmem>>
    %75 = tpu.memref_slice %arg10[%c4_i32_48] : memref<8x!tpu.dma_semaphore, #tpu.memory_space<semaphore_mem>> -> memref<1x!tpu.dma_semaphore, #tpu.memory_space<semaphore_mem>>
    %76 = tpu.memref_squeeze %75 : memref<1x!tpu.dma_semaphore, #tpu.memory_space<semaphore_mem>> -> memref<!tpu.dma_semaphore, #tpu.memory_space<semaphore_mem>>
    tpu.wait_dma2 semaphore(%76 : memref<!tpu.dma_semaphore, #tpu.memory_space<semaphore_mem>>) src(%73 : memref<1x32xf32, #tpu.memory_space<any>>) dst(%74 : memref<1x32xf32, #tpu.memory_space<vmem>>)
    %c5_i32_52 = arith.constant 5 : i32
    %c0_i32_53 = arith.constant 0 : i32
    %77 = tpu.memref_slice %arg4[%38, %c0_i32_53] : memref<64x32xf32, #tpu.memory_space<any>> -> memref<1x32xf32, #tpu.memory_space<any>>
    %c5_i32_54 = arith.constant 5 : i32
    %c0_i32_55 = arith.constant 0 : i32
    %78 = tpu.memref_slice %arg9[%c5_i32_54, %c0_i32_55] : memref<8x32xf32, #tpu.memory_space<vmem>> -> memref<1x32xf32, #tpu.memory_space<vmem>>
    %79 = tpu.memref_slice %arg10[%c5_i32_52] : memref<8x!tpu.dma_semaphore, #tpu.memory_space<semaphore_mem>> -> memref<1x!tpu.dma_semaphore, #tpu.memory_space<semaphore_mem>>
    %80 = tpu.memref_squeeze %79 : memref<1x!tpu.dma_semaphore, #tpu.memory_space<semaphore_mem>> -> memref<!tpu.dma_semaphore, #tpu.memory_space<semaphore_mem>>
    tpu.wait_dma2 semaphore(%80 : memref<!tpu.dma_semaphore, #tpu.memory_space<semaphore_mem>>) src(%77 : memref<1x32xf32, #tpu.memory_space<any>>) dst(%78 : memref<1x32xf32, #tpu.memory_space<vmem>>)
    %c6_i32_56 = arith.constant 6 : i32
    %c0_i32_57 = arith.constant 0 : i32
    %81 = tpu.memref_slice %arg4[%45, %c0_i32_57] : memref<64x32xf32, #tpu.memory_space<any>> -> memref<1x32xf32, #tpu.memory_space<any>>
    %c6_i32_58 = arith.constant 6 : i32
    %c0_i32_59 = arith.constant 0 : i32
    %82 = tpu.memref_slice %arg9[%c6_i32_58, %c0_i32_59] : memref<8x32xf32, #tpu.memory_space<vmem>> -> memref<1x32xf32, #tpu.memory_space<vmem>>
    %83 = tpu.memref_slice %arg10[%c6_i32_56] : memref<8x!tpu.dma_semaphore, #tpu.memory_space<semaphore_mem>> -> memref<1x!tpu.dma_semaphore, #tpu.memory_space<semaphore_mem>>
    %84 = tpu.memref_squeeze %83 : memref<1x!tpu.dma_semaphore, #tpu.memory_space<semaphore_mem>> -> memref<!tpu.dma_semaphore, #tpu.memory_space<semaphore_mem>>
    tpu.wait_dma2 semaphore(%84 : memref<!tpu.dma_semaphore, #tpu.memory_space<semaphore_mem>>) src(%81 : memref<1x32xf32, #tpu.memory_space<any>>) dst(%82 : memref<1x32xf32, #tpu.memory_space<vmem>>)
    %c7_i32_60 = arith.constant 7 : i32
    %c0_i32_61 = arith.constant 0 : i32
    %85 = tpu.memref_slice %arg4[%52, %c0_i32_61] : memref<64x32xf32, #tpu.memory_space<any>> -> memref<1x32xf32, #tpu.memory_space<any>>
    %c7_i32_62 = arith.constant 7 : i32
    %c0_i32_63 = arith.constant 0 : i32
    %86 = tpu.memref_slice %arg9[%c7_i32_62, %c0_i32_63] : memref<8x32xf32, #tpu.memory_space<vmem>> -> memref<1x32xf32, #tpu.memory_space<vmem>>
    %87 = tpu.memref_slice %arg10[%c7_i32_60] : memref<8x!tpu.dma_semaphore, #tpu.memory_space<semaphore_mem>> -> memref<1x!tpu.dma_semaphore, #tpu.memory_space<semaphore_mem>>
    %88 = tpu.memref_squeeze %87 : memref<1x!tpu.dma_semaphore, #tpu.memory_space<semaphore_mem>> -> memref<!tpu.dma_semaphore, #tpu.memory_space<semaphore_mem>>
    tpu.wait_dma2 semaphore(%88 : memref<!tpu.dma_semaphore, #tpu.memory_space<semaphore_mem>>) src(%85 : memref<1x32xf32, #tpu.memory_space<any>>) dst(%86 : memref<1x32xf32, #tpu.memory_space<vmem>>)
    %c0 = arith.constant 0 : index
    %c0_64 = arith.constant 0 : index
    %89 = vector.load %arg9[%c0, %c0_64] : memref<8x32xf32, #tpu.memory_space<vmem>>, vector<8x32xf32>
    %c0_65 = arith.constant 0 : index
    %c0_66 = arith.constant 0 : index
    %90 = vector.load %arg2[%c0_65, %c0_66] : memref<8x64xf32, #tpu.memory_space<vmem>>, vector<8x64xf32>
    %c0_67 = arith.constant 0 : index
    %c0_68 = arith.constant 0 : index
    %91 = vector.load %arg7[%c0_67, %c0_68] : memref<64x128xf32, #tpu.memory_space<vmem>>, vector<64x128xf32>
    %cst = arith.constant dense<0.000000e+00> : vector<8x128xf32>
    %92 = tpu.matmul %90, %91, %cst {dimension_numbers = #tpu.dot_dimension_numbers<[1], [0], [0], [1], [0, 0, 1, 1], [], []>} : vector<8x64xf32>, vector<64x128xf32>, vector<8x128xf32> -> vector<8x128xf32>
    %c0_69 = arith.constant 0 : index
    %c0_70 = arith.constant 0 : index
    %93 = vector.load %arg5[%c0_69, %c0_70] : memref<32x512xf32, #tpu.memory_space<vmem>>, vector<32x512xf32>
    %cst_71 = arith.constant dense<0.000000e+00> : vector<8x512xf32>
    %94 = tpu.matmul %89, %93, %cst_71 {dimension_numbers = #tpu.dot_dimension_numbers<[1], [0], [0], [1], [0, 0, 1, 1], [], []>} : vector<8x32xf32>, vector<32x512xf32>, vector<8x512xf32> -> vector<8x512xf32>
    %c0_72 = arith.constant 0 : index
    %c0_73 = arith.constant 0 : index
    %95 = vector.load %arg6[%c0_72, %c0_73] : memref<64x512xf32, #tpu.memory_space<vmem>>, vector<64x512xf32>
    %cst_74 = arith.constant dense<0.000000e+00> : vector<8x512xf32>
    %96 = tpu.matmul %90, %95, %cst_74 {dimension_numbers = #tpu.dot_dimension_numbers<[1], [0], [0], [1], [0, 0, 1, 1], [], []>} : vector<8x64xf32>, vector<64x512xf32>, vector<8x512xf32> -> vector<8x512xf32>
    %97 = arith.addf %94, %96 : vector<8x512xf32>
    %98 = vector.extract_strided_slice %97 {offsets = [0, 0], sizes = [8, 128], strides = [1, 1]} : vector<8x512xf32> to vector<8x128xf32>
    %99 = arith.negf %98 : vector<8x128xf32>
    %100 = math.exp %99 : vector<8x128xf32>
    %cst_75 = arith.constant 1.000000e+00 : f32
    %101 = vector.broadcast %cst_75 : f32 to vector<8x128xf32>
    %102 = arith.addf %101, %100 : vector<8x128xf32>
    %103 = arith.divf %101, %102 : vector<8x128xf32>
    %104 = vector.extract_strided_slice %97 {offsets = [0, 128], sizes = [8, 128], strides = [1, 1]} : vector<8x512xf32> to vector<8x128xf32>
    %105 = arith.negf %104 : vector<8x128xf32>
    %106 = math.exp %105 : vector<8x128xf32>
    %cst_76 = arith.constant 1.000000e+00 : f32
    %107 = vector.broadcast %cst_76 : f32 to vector<8x128xf32>
    %108 = arith.addf %107, %106 : vector<8x128xf32>
    %109 = arith.divf %107, %108 : vector<8x128xf32>
    %110 = vector.extract_strided_slice %97 {offsets = [0, 256], sizes = [8, 128], strides = [1, 1]} : vector<8x512xf32> to vector<8x128xf32>
    %111 = math.tanh %110 : vector<8x128xf32>
    %112 = vector.extract_strided_slice %97 {offsets = [0, 384], sizes = [8, 128], strides = [1, 1]} : vector<8x512xf32> to vector<8x128xf32>
    %113 = arith.negf %112 : vector<8x128xf32>
    %114 = math.exp %113 : vector<8x128xf32>
    %cst_77 = arith.constant 1.000000e+00 : f32
    %115 = vector.broadcast %cst_77 : f32 to vector<8x128xf32>
    %116 = arith.addf %115, %114 : vector<8x128xf32>
    %117 = arith.divf %115, %116 : vector<8x128xf32>
    %118 = arith.mulf %109, %92 : vector<8x128xf32>
    %119 = arith.mulf %103, %111 : vector<8x128xf32>
    %120 = arith.addf %118, %119 : vector<8x128xf32>
    %121 = math.tanh %120 : vector<8x128xf32>
    %122 = arith.mulf %117, %121 : vector<8x128xf32>
    %c0_78 = arith.constant 0 : index
    %c0_79 = arith.constant 0 : index
    %123 = vector.load %arg8[%c0_78, %c0_79] : memref<8x128xf32, #tpu.memory_space<vmem>>, vector<8x128xf32>
    tpu.vector_store %arg8[%c0_78, %c0_79], %122 {strides = array<i32>} : memref<8x128xf32, #tpu.memory_space<vmem>>, vector<8x128xf32>,
    return
  }
  func.func @transform_0(%arg0: i32, %arg1: memref<8xi32, #tpu.memory_space<smem>>) -> (i32, i32) {
    %c0_i32 = arith.constant 0 : i32
    %c0_i32_0 = arith.constant 0 : i32
    return %arg0, %c0_i32 : i32, i32
  }
  func.func @transform_1(%arg0: i32, %arg1: memref<8xi32, #tpu.memory_space<smem>>) -> (i32, i32) {
    %c0_i32 = arith.constant 0 : i32
    %c0_i32_0 = arith.constant 0 : i32
    return %arg0, %c0_i32 : i32, i32
  }
  func.func @transform_3(%arg0: i32, %arg1: memref<8xi32, #tpu.memory_space<smem>>) -> (i32, i32) {
    %c0_i32 = arith.constant 0 : i32
    %c0_i32_0 = arith.constant 0 : i32
    %c0_i32_1 = arith.constant 0 : i32
    return %c0_i32, %c0_i32_0 : i32, i32
  }
  func.func @transform_4(%arg0: i32, %arg1: memref<8xi32, #tpu.memory_space<smem>>) -> (i32, i32) {
    %c0_i32 = arith.constant 0 : i32
    %c0_i32_0 = arith.constant 0 : i32
    %c0_i32_1 = arith.constant 0 : i32
    return %c0_i32, %c0_i32_0 : i32, i32
  }
  func.func @transform_5(%arg0: i32, %arg1: memref<8xi32, #tpu.memory_space<smem>>) -> (i32, i32) {
    %c0_i32 = arith.constant 0 : i32
    %c0_i32_0 = arith.constant 0 : i32
    %c0_i32_1 = arith.constant 0 : i32
    return %c0_i32, %c0_i32_0 : i32, i32
  }
  func.func @transform_6(%arg0: i32, %arg1: memref<8xi32, #tpu.memory_space<smem>>) -> (i32, i32) {
    %c0_i32 = arith.constant 0 : i32
    %c0_i32_0 = arith.constant 0 : i32
    return %arg0, %c0_i32 : i32, i32
  }
}

</mosaic_0001>

<llo_original>
// kernel: tpu_custom_call.1
$region0: #{tpu_custom_call.1}
  #allocation0 [shape = 'u32[]', space=smem, size = 0x4, offset = 0x4, fixed_abs, tag = 'smem constant byte address 0x4 - core index']
  #allocation1 [shape = 'u32[72,128]{1,0:T(1,128)}', space=vmem, size = 0x9000, scoped, tag = 'internal scratch']
  #allocation2 [shape = 'f32[8,32]{1,0:T(8,128)}', space=vmem, size = 0x1000, scoped, tag = 'scratch operand']
  #allocation3 [shape = 's32[8]{0}', space=sflag, size = 0x20, scoped, tag = 'scratch operand']
  #allocation4 [shape = 's32[1]{0}', space=sflag, size = 0x4, scoped, tag = 'scoped memory for tpu_custom_call.1']
  #allocation5 [shape = 'u8[512]{0}', space=smem, size = 0x200, scoped, tag = 'prefetched SMEM operand 0']
  #allocation12 [shape = 's32[]', space=sflag, size = 0x4, offset = 0, fixed_abs, tag = 'sflag constant byte address 0x0 - dummy sync flag']
  #allocation13 [shape = 's32[]', space=sflag, size = 0x4, offset = 0, fixed_abs, tag = 'sflag constant byte address 0x0 - dummy sync flag']
  #allocation14 [shape = 's32[]', space=sflag, size = 0x4, offset = 0, fixed_abs, tag = 'sflag constant byte address 0x0 - dummy sync flag']
  #allocation15 [shape = 's32[]', space=sflag, size = 0x4, offset = 0, fixed_abs, tag = 'sflag constant byte address 0x0 - dummy sync flag']
  #allocation16 [shape = 's32[]', space=sflag, size = 0x4, offset = 0, fixed_abs, tag = 'sflag constant byte address 0x0 - dummy sync flag']
  #allocation17 [shape = 's32[]', space=sflag, size = 0x4, offset = 0, fixed_abs, tag = 'sflag constant byte address 0x0 - dummy sync flag']
  #allocation18 [shape = 's32[]', space=sflag, size = 0x4, offset = 0, fixed_abs, tag = 'sflag constant byte address 0x0 - dummy sync flag']
  #allocation19 [shape = 's32[]', space=sflag, size = 0x4, offset = 0, fixed_abs, tag = 'sflag constant byte address 0x0 - dummy sync flag']
  %s0 = inlined_call_operand.vmem [shape: s32[8], index: 0, kind: input, shape index: {}]
  %s1 = inlined_call_operand.vmem [shape: f32[8,64], index: 1, kind: input, shape index: {}]
  %s2 = inlined_call_operand.vmem [shape: f32[8,32], index: 2, kind: input, shape index: {}]
  %s3 = inlined_call_operand.vmem [shape: f32[64,32], index: 3, kind: input, shape index: {}]
  %s4 = inlined_call_operand.hbm [shape: f32[32,512], index: 4, kind: input, shape index: {}]
  %s5 = inlined_call_operand.hbm [shape: f32[64,512], index: 5, kind: input, shape index: {}]
  %s6 = inlined_call_operand.vmem [shape: f32[64,128], index: 6, kind: input, shape index: {}]
  %s7 = inlined_call_operand.hbm [shape: f32[8,128], index: 7, kind: output, shape index: {}]
  %s8 = sld [smem:[#allocation0]]
  $region278: #{tpu_custom_call.1} parent=0
    _
  %s10 = ssub.s32 1, %s8
  %s11 = scalar_select 0, %s10, %s8
  %s13 = sshll.u32 %s0, 4
  %s14 = int_to_ptr.vmem [resolvable:$true] %s13
  %16 = dma.vmem_to_smem %s14, 16, [#allocation5], [#allocation4]
  %18 = dma.done [#allocation4], 16
  %19 = sfence
  $region1: #{tpu_custom_call.1} parent=0
    #allocation6 [shape = 'u8[65536]{0}', space=vmem, size = 0x10000, scoped, tag = 'input window, operand 4, single buffered']
    #allocation7 [shape = 's32[1]{0}', space=sflag, size = 0x4, scoped, tag = 'scoped memory for tpu_custom_call.1']
    #allocation8 [shape = 's32[1]{0}', space=sflag, size = 0x4, scoped, tag = 'scoped memory for tpu_custom_call.1']
    #allocation9 [shape = 'u8[131072]{0}', space=vmem, size = 0x20000, scoped, tag = 'input window, operand 5, single buffered']
    #allocation10 [shape = 's32[1]{0}', space=sflag, size = 0x4, scoped, tag = 'scoped memory for tpu_custom_call.1']
    #allocation11 [shape = 'u8[4096]{0}', space=vmem, size = 0x1000, scoped, tag = 'output window, operand 0, single buffered']
    %20 = vsyncpa [#allocation7], 0
    %21 = vsyncpa [#allocation10], 0
    %22 = vsyncpa [#allocation8], 0
    // Predicated region
    $region2: #{tpu_custom_call.1} parent=1 // pred_check
      _
    $region3: #{tpu_custom_call.1} parent=1 // pred_check_branch
      %24 = sbr.rel (0) target = $region5
    $region4: #{tpu_custom_call.1} parent=1 // pred_region
      _
    $region5: #{tpu_custom_call.1} parent=1 // pred_fallthru
      _
    // Predicated region
    $region6: #{tpu_custom_call.1} parent=1 // pred_check
      _
    $region7: #{tpu_custom_call.1} parent=1 // pred_check_branch
      %26 = sbr.rel (0) target = $region9
    $region8: #{tpu_custom_call.1} parent=1 // pred_region
      _
    $region9: #{tpu_custom_call.1} parent=1 // pred_fallthru
      _
    // Predicated region
    $region10: #{tpu_custom_call.1} parent=1 // pred_check
      _
    $region11: #{tpu_custom_call.1} parent=1 // pred_check_branch
      %28 = sbr.rel (0) target = $region13
    $region12: #{tpu_custom_call.1} parent=1 // pred_region
      %30 = vsyncadd [#allocation7], 0
      %s31 = sshll.u32 %s4, 4
      %s32 = int_to_ptr.hbm [resolvable:$true] %s31
      %s33 = sshll.u32 [#allocation6], 4
      %s34 = int_to_ptr.vmem [resolvable:$true] %s33
      %39 = dma.hbm_to_vmem [thread:$0]  %s32, 2048, %s34, [#allocation7], 512, 512, 32
    $region13: #{tpu_custom_call.1} parent=1 // pred_fallthru
      _
    // Predicated region
    $region14: #{tpu_custom_call.1} parent=1 // pred_check
      _
    $region15: #{tpu_custom_call.1} parent=1 // pred_check_branch
      %41 = sbr.rel (0) target = $region17
    $region16: #{tpu_custom_call.1} parent=1 // pred_region
      %43 = vsyncadd [#allocation10], 0
      %s44 = sshll.u32 %s5, 4
      %s45 = int_to_ptr.hbm [resolvable:$true] %s44
      %s46 = sshll.u32 [#allocation9], 4
      %s47 = int_to_ptr.vmem [resolvable:$true] %s46
      %52 = dma.hbm_to_vmem [thread:$0]  %s45, 4096, %s47, [#allocation10], 512, 512, 32
    $region17: #{tpu_custom_call.1} parent=1 // pred_fallthru
      _
    // Predicated region
    $region18: #{tpu_custom_call.1} parent=1 // pred_check
      _
    $region19: #{tpu_custom_call.1} parent=1 // pred_check_branch
      %54 = sbr.rel (0) target = $region21
    $region20: #{tpu_custom_call.1} parent=1 // pred_region
      _
    $region21: #{tpu_custom_call.1} parent=1 // pred_fallthru
      _
    // Predicated region
    $region22: #{tpu_custom_call.1} parent=1 // pred_check
      _
    $region23: #{tpu_custom_call.1} parent=1 // pred_check_branch
      %56 = sbr.rel (0) target = $region25
    $region24: #{tpu_custom_call.1} parent=1 // pred_region
      %58 = dma.done [#allocation7], 2048
    $region25: #{tpu_custom_call.1} parent=1 // pred_fallthru
      _
    // Predicated region
    $region26: #{tpu_custom_call.1} parent=1 // pred_check
      _
    $region27: #{tpu_custom_call.1} parent=1 // pred_check_branch
      %60 = sbr.rel (0) target = $region29
    $region28: #{tpu_custom_call.1} parent=1 // pred_region
      %62 = dma.done [#allocation10], 4096
    $region29: #{tpu_custom_call.1} parent=1 // pred_fallthru
      _
    %s63 = smul.u32 0, 8
    %s64 = sld [smem:[#allocation5 + %s63]]
    %s65 = scalar_lea.vmem %s3, %s64
    // Predicated region
    $region30: #{tpu_custom_call.1} parent=1 // pred_check
      _
    $region31: #{tpu_custom_call.1} parent=1 // pred_check_branch
      %67 = sbr.rel target = $region33
    $region32: #{tpu_custom_call.1} parent=1 // pred_region
      // Predicated region
      $region45: #{tpu_custom_call.1} parent=32 // pred_check
        _
      $region46: #{tpu_custom_call.1} parent=32 // pred_check_branch
        %83 = sbr.rel (0) target = $region48
      $region47: #{tpu_custom_call.1} parent=32 // pred_region
        %s85 = ssub.s32 2, 1
        loop: start=0, step=1, limit=1
        $region49: #{tpu_custom_call.1} parent=47 // loop_pre_header
          _
        $region50: #{tpu_custom_call.1} parent=47 // loop_header
          %s87 = sphi 0, %s91
          %p88 = scmp.ge.s32.totalorder %s87, 1
          %s92 = sphi %s65, %s65
          %s93 = sphi [#allocation2], [#allocation2]
        $region51: #{tpu_custom_call.1} parent=47 // loop_header_branch
          %90 = sbr.rel (%p88) target = $region55
        $region52: #{tpu_custom_call.1} parent=47 // loop_body
          %v94 = vld [vmem:[%s92] sm:%s85]
          %95 = vst [vmem:[%s93] sm:%s85] %v94
        $region53: #{tpu_custom_call.1} parent=47 // loop_footer
          %s91 = sadd.s32 1, %s87
        $region54: #{tpu_custom_call.1} parent=47 // loop_footer_branch
          %86 = sbr.rel target = $region50
        $region55: #{tpu_custom_call.1} parent=47 // loop_exit
          _
      $region48: #{tpu_custom_call.1} parent=32 // pred_fallthru
        _
    $region33: #{tpu_custom_call.1} parent=1 // pred_fallthru
      _
    // Predicated region
    $region34: #{tpu_custom_call.1} parent=1 // pred_check
      _
    $region35: #{tpu_custom_call.1} parent=1 // pred_check_branch
      %69 = sbr.rel (0) target = $region37
    $region36: #{tpu_custom_call.1} parent=1 // pred_region
      %s71 = ssub.s32 2, 1
      loop: start=0, step=1, limit=1
      $region38: #{tpu_custom_call.1} parent=36 // loop_pre_header
        _
      $region39: #{tpu_custom_call.1} parent=36 // loop_header
        %s73 = sphi 0, %s77
        %p74 = scmp.ge.s32.totalorder %s73, 1
        %s78 = sphi %s65, %s65
        %s79 = sphi [#allocation2], [#allocation2]
      $region40: #{tpu_custom_call.1} parent=36 // loop_header_branch
        %76 = sbr.rel (%p74) target = $region44
      $region41: #{tpu_custom_call.1} parent=36 // loop_body
        %v80 = vld [vmem:[%s78] sm:%s71]
        %81 = vst [vmem:[%s79] sm:%s71] %v80
      $region42: #{tpu_custom_call.1} parent=36 // loop_footer
        %s77 = sadd.s32 1, %s73
      $region43: #{tpu_custom_call.1} parent=36 // loop_footer_branch
        %72 = sbr.rel target = $region39
      $region44: #{tpu_custom_call.1} parent=36 // loop_exit
        _
    $region37: #{tpu_custom_call.1} parent=1 // pred_fallthru
      _
    // Predicated region
    $region56: #{tpu_custom_call.1} parent=1 // pred_check
      _
    $region57: #{tpu_custom_call.1} parent=1 // pred_check_branch
      %98 = sbr.rel (0) target = $region59
    $region58: #{tpu_custom_call.1} parent=1 // pred_region
      %99 = vsyncadd [#allocation3], 16
    $region59: #{tpu_custom_call.1} parent=1 // pred_fallthru
      _
    %s100 = sadd.s32 %s63, 1
    %s101 = sld [smem:[#allocation5 + %s100]]
    %s102 = scalar_lea.vmem %s3, %s101
    %s103 = scalar_lea.vmem [#allocation2], 1
    %s104 = scalar_lea.sflag [#allocation3], 1
    // Predicated region
    $region60: #{tpu_custom_call.1} parent=1 // pred_check
      _
    $region61: #{tpu_custom_call.1} parent=1 // pred_check_branch
      %106 = sbr.rel target = $region63
    $region62: #{tpu_custom_call.1} parent=1 // pred_region
      // Predicated region
      $region75: #{tpu_custom_call.1} parent=62 // pred_check
        _
      $region76: #{tpu_custom_call.1} parent=62 // pred_check_branch
        %122 = sbr.rel (0) target = $region78
      $region77: #{tpu_custom_call.1} parent=62 // pred_region
        %s124 = ssub.s32 2, 1
        loop: start=0, step=1, limit=1
        $region79: #{tpu_custom_call.1} parent=77 // loop_pre_header
          _
        $region80: #{tpu_custom_call.1} parent=77 // loop_header
          %s126 = sphi 0, %s130
          %p127 = scmp.ge.s32.totalorder %s126, 1
          %s131 = sphi %s102, %s102
          %s132 = sphi %s103, %s103
        $region81: #{tpu_custom_call.1} parent=77 // loop_header_branch
          %129 = sbr.rel (%p127) target = $region85
        $region82: #{tpu_custom_call.1} parent=77 // loop_body
          %v133 = vld [vmem:[%s131] sm:%s124]
          %134 = vst [vmem:[%s132] sm:%s124] %v133
        $region83: #{tpu_custom_call.1} parent=77 // loop_footer
          %s130 = sadd.s32 1, %s126
        $region84: #{tpu_custom_call.1} parent=77 // loop_footer_branch
          %125 = sbr.rel target = $region80
        $region85: #{tpu_custom_call.1} parent=77 // loop_exit
          _
      $region78: #{tpu_custom_call.1} parent=62 // pred_fallthru
        _
    $region63: #{tpu_custom_call.1} parent=1 // pred_fallthru
      _
    // Predicated region
    $region64: #{tpu_custom_call.1} parent=1 // pred_check
      _
    $region65: #{tpu_custom_call.1} parent=1 // pred_check_branch
      %108 = sbr.rel (0) target = $region67
    $region66: #{tpu_custom_call.1} parent=1 // pred_region
      %s110 = ssub.s32 2, 1
      loop: start=0, step=1, limit=1
      $region68: #{tpu_custom_call.1} parent=66 // loop_pre_header
        _
      $region69: #{tpu_custom_call.1} parent=66 // loop_header
        %s112 = sphi 0, %s116
        %p113 = scmp.ge.s32.totalorder %s112, 1
        %s117 = sphi %s102, %s102
        %s118 = sphi %s103, %s103
      $region70: #{tpu_custom_call.1} parent=66 // loop_header_branch
        %115 = sbr.rel (%p113) target = $region74
      $region71: #{tpu_custom_call.1} parent=66 // loop_body
        %v119 = vld [vmem:[%s117] sm:%s110]
        %120 = vst [vmem:[%s118] sm:%s110] %v119
      $region72: #{tpu_custom_call.1} parent=66 // loop_footer
        %s116 = sadd.s32 1, %s112
      $region73: #{tpu_custom_call.1} parent=66 // loop_footer_branch
        %111 = sbr.rel target = $region69
      $region74: #{tpu_custom_call.1} parent=66 // loop_exit
        _
    $region67: #{tpu_custom_call.1} parent=1 // pred_fallthru
      _
    // Predicated region
    $region86: #{tpu_custom_call.1} parent=1 // pred_check
      _
    $region87: #{tpu_custom_call.1} parent=1 // pred_check_branch
      %137 = sbr.rel (0) target = $region89
    $region88: #{tpu_custom_call.1} parent=1 // pred_region
      %138 = vsyncadd %s104, 16
    $region89: #{tpu_custom_call.1} parent=1 // pred_fallthru
      _
    %s139 = sadd.s32 %s63, 2
    %s140 = sld [smem:[#allocation5 + %s139]]
    %s141 = scalar_lea.vmem %s3, %s140
    %s142 = scalar_lea.vmem [#allocation2], 2
    %s143 = scalar_lea.sflag [#allocation3], 2
    // Predicated region
    $region90: #{tpu_custom_call.1} parent=1 // pred_check
      _
    $region91: #{tpu_custom_call.1} parent=1 // pred_check_branch
      %145 = sbr.rel target = $region93
    $region92: #{tpu_custom_call.1} parent=1 // pred_region
      // Predicated region
      $region105: #{tpu_custom_call.1} parent=92 // pred_check
        _
      $region106: #{tpu_custom_call.1} parent=92 // pred_check_branch
        %161 = sbr.rel (0) target = $region108
      $region107: #{tpu_custom_call.1} parent=92 // pred_region
        %s163 = ssub.s32 2, 1
        loop: start=0, step=1, limit=1
        $region109: #{tpu_custom_call.1} parent=107 // loop_pre_header
          _
        $region110: #{tpu_custom_call.1} parent=107 // loop_header
          %s165 = sphi 0, %s169
          %p166 = scmp.ge.s32.totalorder %s165, 1
          %s170 = sphi %s141, %s141
          %s171 = sphi %s142, %s142
        $region111: #{tpu_custom_call.1} parent=107 // loop_header_branch
          %168 = sbr.rel (%p166) target = $region115
        $region112: #{tpu_custom_call.1} parent=107 // loop_body
          %v172 = vld [vmem:[%s170] sm:%s163]
          %173 = vst [vmem:[%s171] sm:%s163] %v172
        $region113: #{tpu_custom_call.1} parent=107 // loop_footer
          %s169 = sadd.s32 1, %s165
        $region114: #{tpu_custom_call.1} parent=107 // loop_footer_branch
          %164 = sbr.rel target = $region110
        $region115: #{tpu_custom_call.1} parent=107 // loop_exit
          _
      $region108: #{tpu_custom_call.1} parent=92 // pred_fallthru
        _
    $region93: #{tpu_custom_call.1} parent=1 // pred_fallthru
      _
    // Predicated region
    $region94: #{tpu_custom_call.1} parent=1 // pred_check
      _
    $region95: #{tpu_custom_call.1} parent=1 // pred_check_branch
      %147 = sbr.rel (0) target = $region97
    $region96: #{tpu_custom_call.1} parent=1 // pred_region
      %s149 = ssub.s32 2, 1
      loop: start=0, step=1, limit=1
      $region98: #{tpu_custom_call.1} parent=96 // loop_pre_header
        _
      $region99: #{tpu_custom_call.1} parent=96 // loop_header
        %s151 = sphi 0, %s155
        %p152 = scmp.ge.s32.totalorder %s151, 1
        %s156 = sphi %s141, %s141
        %s157 = sphi %s142, %s142
      $region100: #{tpu_custom_call.1} parent=96 // loop_header_branch
        %154 = sbr.rel (%p152) target = $region104
      $region101: #{tpu_custom_call.1} parent=96 // loop_body
        %v158 = vld [vmem:[%s156] sm:%s149]
        %159 = vst [vmem:[%s157] sm:%s149] %v158
      $region102: #{tpu_custom_call.1} parent=96 // loop_footer
        %s155 = sadd.s32 1, %s151
      $region103: #{tpu_custom_call.1} parent=96 // loop_footer_branch
        %150 = sbr.rel target = $region99
      $region104: #{tpu_custom_call.1} parent=96 // loop_exit
        _
    $region97: #{tpu_custom_call.1} parent=1 // pred_fallthru
      _
    // Predicated region
    $region116: #{tpu_custom_call.1} parent=1 // pred_check
      _
    $region117: #{tpu_custom_call.1} parent=1 // pred_check_branch
      %176 = sbr.rel (0) target = $region119
    $region118: #{tpu_custom_call.1} parent=1 // pred_region
      %177 = vsyncadd %s143, 16
    $region119: #{tpu_custom_call.1} parent=1 // pred_fallthru
      _
    %s178 = sadd.s32 %s63, 3
    %s179 = sld [smem:[#allocation5 + %s178]]
    %s180 = scalar_lea.vmem %s3, %s179
    %s181 = scalar_lea.vmem [#allocation2], 3
    %s182 = scalar_lea.sflag [#allocation3], 3
    // Predicated region
    $region120: #{tpu_custom_call.1} parent=1 // pred_check
      _
    $region121: #{tpu_custom_call.1} parent=1 // pred_check_branch
      %184 = sbr.rel target = $region123
    $region122: #{tpu_custom_call.1} parent=1 // pred_region
      // Predicated region
      $region135: #{tpu_custom_call.1} parent=122 // pred_check
        _
      $region136: #{tpu_custom_call.1} parent=122 // pred_check_branch
        %200 = sbr.rel (0) target = $region138
      $region137: #{tpu_custom_call.1} parent=122 // pred_region
        %s202 = ssub.s32 2, 1
        loop: start=0, step=1, limit=1
        $region139: #{tpu_custom_call.1} parent=137 // loop_pre_header
          _
        $region140: #{tpu_custom_call.1} parent=137 // loop_header
          %s204 = sphi 0, %s208
          %p205 = scmp.ge.s32.totalorder %s204, 1
          %s209 = sphi %s180, %s180
          %s210 = sphi %s181, %s181
        $region141: #{tpu_custom_call.1} parent=137 // loop_header_branch
          %207 = sbr.rel (%p205) target = $region145
        $region142: #{tpu_custom_call.1} parent=137 // loop_body
          %v211 = vld [vmem:[%s209] sm:%s202]
          %212 = vst [vmem:[%s210] sm:%s202] %v211
        $region143: #{tpu_custom_call.1} parent=137 // loop_footer
          %s208 = sadd.s32 1, %s204
        $region144: #{tpu_custom_call.1} parent=137 // loop_footer_branch
          %203 = sbr.rel target = $region140
        $region145: #{tpu_custom_call.1} parent=137 // loop_exit
          _
      $region138: #{tpu_custom_call.1} parent=122 // pred_fallthru
        _
    $region123: #{tpu_custom_call.1} parent=1 // pred_fallthru
      _
    // Predicated region
    $region124: #{tpu_custom_call.1} parent=1 // pred_check
      _
    $region125: #{tpu_custom_call.1} parent=1 // pred_check_branch
      %186 = sbr.rel (0) target = $region127
    $region126: #{tpu_custom_call.1} parent=1 // pred_region
      %s188 = ssub.s32 2, 1
      loop: start=0, step=1, limit=1
      $region128: #{tpu_custom_call.1} parent=126 // loop_pre_header
        _
      $region129: #{tpu_custom_call.1} parent=126 // loop_header
        %s190 = sphi 0, %s194
        %p191 = scmp.ge.s32.totalorder %s190, 1
        %s195 = sphi %s180, %s180
        %s196 = sphi %s181, %s181
      $region130: #{tpu_custom_call.1} parent=126 // loop_header_branch
        %193 = sbr.rel (%p191) target = $region134
      $region131: #{tpu_custom_call.1} parent=126 // loop_body
        %v197 = vld [vmem:[%s195] sm:%s188]
        %198 = vst [vmem:[%s196] sm:%s188] %v197
      $region132: #{tpu_custom_call.1} parent=126 // loop_footer
        %s194 = sadd.s32 1, %s190
      $region133: #{tpu_custom_call.1} parent=126 // loop_footer_branch
        %189 = sbr.rel target = $region129
      $region134: #{tpu_custom_call.1} parent=126 // loop_exit
        _
    $region127: #{tpu_custom_call.1} parent=1 // pred_fallthru
      _
    // Predicated region
    $region146: #{tpu_custom_call.1} parent=1 // pred_check
      _
    $region147: #{tpu_custom_call.1} parent=1 // pred_check_branch
      %215 = sbr.rel (0) target = $region149
    $region148: #{tpu_custom_call.1} parent=1 // pred_region
      %216 = vsyncadd %s182, 16
    $region149: #{tpu_custom_call.1} parent=1 // pred_fallthru
      _
    %s217 = sadd.s32 %s63, 4
    %s218 = sld [smem:[#allocation5 + %s217]]
    %s219 = scalar_lea.vmem %s3, %s218
    %s220 = scalar_lea.vmem [#allocation2], 4
    %s221 = scalar_lea.sflag [#allocation3], 4
    // Predicated region
    $region150: #{tpu_custom_call.1} parent=1 // pred_check
      _
    $region151: #{tpu_custom_call.1} parent=1 // pred_check_branch
      %223 = sbr.rel target = $region153
    $region152: #{tpu_custom_call.1} parent=1 // pred_region
      // Predicated region
      $region165: #{tpu_custom_call.1} parent=152 // pred_check
        _
      $region166: #{tpu_custom_call.1} parent=152 // pred_check_branch
        %239 = sbr.rel (0) target = $region168
      $region167: #{tpu_custom_call.1} parent=152 // pred_region
        %s241 = ssub.s32 2, 1
        loop: start=0, step=1, limit=1
        $region169: #{tpu_custom_call.1} parent=167 // loop_pre_header
          _
        $region170: #{tpu_custom_call.1} parent=167 // loop_header
          %s243 = sphi 0, %s247
          %p244 = scmp.ge.s32.totalorder %s243, 1
          %s248 = sphi %s219, %s219
          %s249 = sphi %s220, %s220
        $region171: #{tpu_custom_call.1} parent=167 // loop_header_branch
          %246 = sbr.rel (%p244) target = $region175
        $region172: #{tpu_custom_call.1} parent=167 // loop_body
          %v250 = vld [vmem:[%s248] sm:%s241]
          %251 = vst [vmem:[%s249] sm:%s241] %v250
        $region173: #{tpu_custom_call.1} parent=167 // loop_footer
          %s247 = sadd.s32 1, %s243
        $region174: #{tpu_custom_call.1} parent=167 // loop_footer_branch
          %242 = sbr.rel target = $region170
        $region175: #{tpu_custom_call.1} parent=167 // loop_exit
          _
      $region168: #{tpu_custom_call.1} parent=152 // pred_fallthru
        _
    $region153: #{tpu_custom_call.1} parent=1 // pred_fallthru
      _
    // Predicated region
    $region154: #{tpu_custom_call.1} parent=1 // pred_check
      _
    $region155: #{tpu_custom_call.1} parent=1 // pred_check_branch
      %225 = sbr.rel (0) target = $region157
    $region156: #{tpu_custom_call.1} parent=1 // pred_region
      %s227 = ssub.s32 2, 1
      loop: start=0, step=1, limit=1
      $region158: #{tpu_custom_call.1} parent=156 // loop_pre_header
        _
      $region159: #{tpu_custom_call.1} parent=156 // loop_header
        %s229 = sphi 0, %s233
        %p230 = scmp.ge.s32.totalorder %s229, 1
        %s234 = sphi %s219, %s219
        %s235 = sphi %s220, %s220
      $region160: #{tpu_custom_call.1} parent=156 // loop_header_branch
        %232 = sbr.rel (%p230) target = $region164
      $region161: #{tpu_custom_call.1} parent=156 // loop_body
        %v236 = vld [vmem:[%s234] sm:%s227]
        %237 = vst [vmem:[%s235] sm:%s227] %v236
      $region162: #{tpu_custom_call.1} parent=156 // loop_footer
        %s233 = sadd.s32 1, %s229
      $region163: #{tpu_custom_call.1} parent=156 // loop_footer_branch
        %228 = sbr.rel target = $region159
      $region164: #{tpu_custom_call.1} parent=156 // loop_exit
        _
    $region157: #{tpu_custom_call.1} parent=1 // pred_fallthru
      _
    // Predicated region
    $region176: #{tpu_custom_call.1} parent=1 // pred_check
      _
    $region177: #{tpu_custom_call.1} parent=1 // pred_check_branch
      %254 = sbr.rel (0) target = $region179
    $region178: #{tpu_custom_call.1} parent=1 // pred_region
      %255 = vsyncadd %s221, 16
    $region179: #{tpu_custom_call.1} parent=1 // pred_fallthru
      _
    %s256 = sadd.s32 %s63, 5
    %s257 = sld [smem:[#allocation5 + %s256]]
    %s258 = scalar_lea.vmem %s3, %s257
    %s259 = scalar_lea.vmem [#allocation2], 5
    %s260 = scalar_lea.sflag [#allocation3], 5
    // Predicated region
    $region180: #{tpu_custom_call.1} parent=1 // pred_check
      _
    $region181: #{tpu_custom_call.1} parent=1 // pred_check_branch
      %262 = sbr.rel target = $region183
    $region182: #{tpu_custom_call.1} parent=1 // pred_region
      // Predicated region
      $region195: #{tpu_custom_call.1} parent=182 // pred_check
        _
      $region196: #{tpu_custom_call.1} parent=182 // pred_check_branch
        %278 = sbr.rel (0) target = $region198
      $region197: #{tpu_custom_call.1} parent=182 // pred_region
        %s280 = ssub.s32 2, 1
        loop: start=0, step=1, limit=1
        $region199: #{tpu_custom_call.1} parent=197 // loop_pre_header
          _
        $region200: #{tpu_custom_call.1} parent=197 // loop_header
          %s282 = sphi 0, %s286
          %p283 = scmp.ge.s32.totalorder %s282, 1
          %s287 = sphi %s258, %s258
          %s288 = sphi %s259, %s259
        $region201: #{tpu_custom_call.1} parent=197 // loop_header_branch
          %285 = sbr.rel (%p283) target = $region205
        $region202: #{tpu_custom_call.1} parent=197 // loop_body
          %v289 = vld [vmem:[%s287] sm:%s280]
          %290 = vst [vmem:[%s288] sm:%s280] %v289
        $region203: #{tpu_custom_call.1} parent=197 // loop_footer
          %s286 = sadd.s32 1, %s282
        $region204: #{tpu_custom_call.1} parent=197 // loop_footer_branch
          %281 = sbr.rel target = $region200
        $region205: #{tpu_custom_call.1} parent=197 // loop_exit
          _
      $region198: #{tpu_custom_call.1} parent=182 // pred_fallthru
        _
    $region183: #{tpu_custom_call.1} parent=1 // pred_fallthru
      _
    // Predicated region
    $region184: #{tpu_custom_call.1} parent=1 // pred_check
      _
    $region185: #{tpu_custom_call.1} parent=1 // pred_check_branch
      %264 = sbr.rel (0) target = $region187
    $region186: #{tpu_custom_call.1} parent=1 // pred_region
      %s266 = ssub.s32 2, 1
      loop: start=0, step=1, limit=1
      $region188: #{tpu_custom_call.1} parent=186 // loop_pre_header
        _
      $region189: #{tpu_custom_call.1} parent=186 // loop_header
        %s268 = sphi 0, %s272
        %p269 = scmp.ge.s32.totalorder %s268, 1
        %s273 = sphi %s258, %s258
        %s274 = sphi %s259, %s259
      $region190: #{tpu_custom_call.1} parent=186 // loop_header_branch
        %271 = sbr.rel (%p269) target = $region194
      $region191: #{tpu_custom_call.1} parent=186 // loop_body
        %v275 = vld [vmem:[%s273] sm:%s266]
        %276 = vst [vmem:[%s274] sm:%s266] %v275
      $region192: #{tpu_custom_call.1} parent=186 // loop_footer
        %s272 = sadd.s32 1, %s268
      $region193: #{tpu_custom_call.1} parent=186 // loop_footer_branch
        %267 = sbr.rel target = $region189
      $region194: #{tpu_custom_call.1} parent=186 // loop_exit
        _
    $region187: #{tpu_custom_call.1} parent=1 // pred_fallthru
      _
    // Predicated region
    $region206: #{tpu_custom_call.1} parent=1 // pred_check
      _
    $region207: #{tpu_custom_call.1} parent=1 // pred_check_branch
      %293 = sbr.rel (0) target = $region209
    $region208: #{tpu_custom_call.1} parent=1 // pred_region
      %294 = vsyncadd %s260, 16
    $region209: #{tpu_custom_call.1} parent=1 // pred_fallthru
      _
    %s295 = sadd.s32 %s63, 6
    %s296 = sld [smem:[#allocation5 + %s295]]
    %s297 = scalar_lea.vmem %s3, %s296
    %s298 = scalar_lea.vmem [#allocation2], 6
    %s299 = scalar_lea.sflag [#allocation3], 6
    // Predicated region
    $region210: #{tpu_custom_call.1} parent=1 // pred_check
      _
    $region211: #{tpu_custom_call.1} parent=1 // pred_check_branch
      %301 = sbr.rel target = $region213
    $region212: #{tpu_custom_call.1} parent=1 // pred_region
      // Predicated region
      $region225: #{tpu_custom_call.1} parent=212 // pred_check
        _
      $region226: #{tpu_custom_call.1} parent=212 // pred_check_branch
        %317 = sbr.rel (0) target = $region228
      $region227: #{tpu_custom_call.1} parent=212 // pred_region
        %s319 = ssub.s32 2, 1
        loop: start=0, step=1, limit=1
        $region229: #{tpu_custom_call.1} parent=227 // loop_pre_header
          _
        $region230: #{tpu_custom_call.1} parent=227 // loop_header
          %s321 = sphi 0, %s325
          %p322 = scmp.ge.s32.totalorder %s321, 1
          %s326 = sphi %s297, %s297
          %s327 = sphi %s298, %s298
        $region231: #{tpu_custom_call.1} parent=227 // loop_header_branch
          %324 = sbr.rel (%p322) target = $region235
        $region232: #{tpu_custom_call.1} parent=227 // loop_body
          %v328 = vld [vmem:[%s326] sm:%s319]
          %329 = vst [vmem:[%s327] sm:%s319] %v328
        $region233: #{tpu_custom_call.1} parent=227 // loop_footer
          %s325 = sadd.s32 1, %s321
        $region234: #{tpu_custom_call.1} parent=227 // loop_footer_branch
          %320 = sbr.rel target = $region230
        $region235: #{tpu_custom_call.1} parent=227 // loop_exit
          _
      $region228: #{tpu_custom_call.1} parent=212 // pred_fallthru
        _
    $region213: #{tpu_custom_call.1} parent=1 // pred_fallthru
      _
    // Predicated region
    $region214: #{tpu_custom_call.1} parent=1 // pred_check
      _
    $region215: #{tpu_custom_call.1} parent=1 // pred_check_branch
      %303 = sbr.rel (0) target = $region217
    $region216: #{tpu_custom_call.1} parent=1 // pred_region
      %s305 = ssub.s32 2, 1
      loop: start=0, step=1, limit=1
      $region218: #{tpu_custom_call.1} parent=216 // loop_pre_header
        _
      $region219: #{tpu_custom_call.1} parent=216 // loop_header
        %s307 = sphi 0, %s311
        %p308 = scmp.ge.s32.totalorder %s307, 1
        %s312 = sphi %s297, %s297
        %s313 = sphi %s298, %s298
      $region220: #{tpu_custom_call.1} parent=216 // loop_header_branch
        %310 = sbr.rel (%p308) target = $region224
      $region221: #{tpu_custom_call.1} parent=216 // loop_body
        %v314 = vld [vmem:[%s312] sm:%s305]
        %315 = vst [vmem:[%s313] sm:%s305] %v314
      $region222: #{tpu_custom_call.1} parent=216 // loop_footer
        %s311 = sadd.s32 1, %s307
      $region223: #{tpu_custom_call.1} parent=216 // loop_footer_branch
        %306 = sbr.rel target = $region219
      $region224: #{tpu_custom_call.1} parent=216 // loop_exit
        _
    $region217: #{tpu_custom_call.1} parent=1 // pred_fallthru
      _
    // Predicated region
    $region236: #{tpu_custom_call.1} parent=1 // pred_check
      _
    $region237: #{tpu_custom_call.1} parent=1 // pred_check_branch
      %332 = sbr.rel (0) target = $region239
    $region238: #{tpu_custom_call.1} parent=1 // pred_region
      %333 = vsyncadd %s299, 16
    $region239: #{tpu_custom_call.1} parent=1 // pred_fallthru
      _
    %s334 = sadd.s32 %s63, 7
    %s335 = sld [smem:[#allocation5 + %s334]]
    %s336 = scalar_lea.vmem %s3, %s335
    %s337 = scalar_lea.vmem [#allocation2], 7
    %s338 = scalar_lea.sflag [#allocation3], 7
    // Predicated region
    $region240: #{tpu_custom_call.1} parent=1 // pred_check
      _
    $region241: #{tpu_custom_call.1} parent=1 // pred_check_branch
      %340 = sbr.rel target = $region243
    $region242: #{tpu_custom_call.1} parent=1 // pred_region
      // Predicated region
      $region255: #{tpu_custom_call.1} parent=242 // pred_check
        _
      $region256: #{tpu_custom_call.1} parent=242 // pred_check_branch
        %356 = sbr.rel (0) target = $region258
      $region257: #{tpu_custom_call.1} parent=242 // pred_region
        %s358 = ssub.s32 2, 1
        loop: start=0, step=1, limit=1
        $region259: #{tpu_custom_call.1} parent=257 // loop_pre_header
          _
        $region260: #{tpu_custom_call.1} parent=257 // loop_header
          %s360 = sphi 0, %s364
          %p361 = scmp.ge.s32.totalorder %s360, 1
          %s365 = sphi %s336, %s336
          %s366 = sphi %s337, %s337
        $region261: #{tpu_custom_call.1} parent=257 // loop_header_branch
          %363 = sbr.rel (%p361) target = $region265
        $region262: #{tpu_custom_call.1} parent=257 // loop_body
          %v367 = vld [vmem:[%s365] sm:%s358]
          %368 = vst [vmem:[%s366] sm:%s358] %v367
        $region263: #{tpu_custom_call.1} parent=257 // loop_footer
          %s364 = sadd.s32 1, %s360
        $region264: #{tpu_custom_call.1} parent=257 // loop_footer_branch
          %359 = sbr.rel target = $region260
        $region265: #{tpu_custom_call.1} parent=257 // loop_exit
          _
      $region258: #{tpu_custom_call.1} parent=242 // pred_fallthru
        _
    $region243: #{tpu_custom_call.1} parent=1 // pred_fallthru
      _
    // Predicated region
    $region244: #{tpu_custom_call.1} parent=1 // pred_check
      _
    $region245: #{tpu_custom_call.1} parent=1 // pred_check_branch
      %342 = sbr.rel (0) target = $region247
    $region246: #{tpu_custom_call.1} parent=1 // pred_region
      %s344 = ssub.s32 2, 1
      loop: start=0, step=1, limit=1
      $region248: #{tpu_custom_call.1} parent=246 // loop_pre_header
        _
      $region249: #{tpu_custom_call.1} parent=246 // loop_header
        %s346 = sphi 0, %s350
        %p347 = scmp.ge.s32.totalorder %s346, 1
        %s351 = sphi %s336, %s336
        %s352 = sphi %s337, %s337
      $region250: #{tpu_custom_call.1} parent=246 // loop_header_branch
        %349 = sbr.rel (%p347) target = $region254
      $region251: #{tpu_custom_call.1} parent=246 // loop_body
        %v353 = vld [vmem:[%s351] sm:%s344]
        %354 = vst [vmem:[%s352] sm:%s344] %v353
      $region252: #{tpu_custom_call.1} parent=246 // loop_footer
        %s350 = sadd.s32 1, %s346
      $region253: #{tpu_custom_call.1} parent=246 // loop_footer_branch
        %345 = sbr.rel target = $region249
      $region254: #{tpu_custom_call.1} parent=246 // loop_exit
        _
    $region247: #{tpu_custom_call.1} parent=1 // pred_fallthru
      _
    // Predicated region
    $region266: #{tpu_custom_call.1} parent=1 // pred_check
      _
    $region267: #{tpu_custom_call.1} parent=1 // pred_check_branch
      %371 = sbr.rel (0) target = $region269
    $region268: #{tpu_custom_call.1} parent=1 // pred_region
      %372 = vsyncadd %s338, 16
    $region269: #{tpu_custom_call.1} parent=1 // pred_fallthru
      _
    %s373 = smul.u32 1, 1
    %s374 = sshll.u32 %s373, 4
    %375 = dma.done [#allocation3], %s374
    %s376 = sshll.u32 %s373, 4
    %377 = dma.done %s104, %s376
    %s378 = sshll.u32 %s373, 4
    %379 = dma.done %s143, %s378
    %s380 = sshll.u32 %s373, 4
    %381 = dma.done %s182, %s380
    %s382 = sshll.u32 %s373, 4
    %383 = dma.done %s221, %s382
    %s384 = sshll.u32 %s373, 4
    %385 = dma.done %s260, %s384
    %s386 = sshll.u32 %s373, 4
    %387 = dma.done %s299, %s386
    %s388 = sshll.u32 %s373, 4
    %389 = dma.done %s338, %s388
    %v390 = vld [vmem:[#allocation2] sm:$0xff]
    %v391 = vld [vmem:[%s1] sm:$0xff]
    %v392 = vld [vmem:[%s6] sm:$0xff]
    %v393 = vld [vmem:[%s6 + $0x8] sm:$0xff]
    %v394 = vld [vmem:[%s6 + $0x10] sm:$0xff]
    %v395 = vld [vmem:[%s6 + $0x18] sm:$0xff]
    %v396 = vld [vmem:[%s6 + $0x20] sm:$0xff]
    %v397 = vld [vmem:[%s6 + $0x28] sm:$0xff]
    %v398 = vld [vmem:[%s6 + $0x30] sm:$0xff]
    %v399 = vld [vmem:[%s6 + $0x38] sm:$0xff]
    %vm400 = vcmask 523264
    %v402 = vsel %vm400, %v391, 0
    %404 = vmatpush.msra.mxu0 0.0
    %405 = vmatpush.msra.mxu0 0.0
    %406 = vmatpush.msra.mxu0 0.0
    %407 = vmatpush.msra.mxu0 0.0
    %408 = vmatpush.msra.mxu0 0.0
    %409 = vmatpush.msra.mxu0 0.0
    %410 = vmatpush.msra.mxu0 0.0
    %411 = vmatpush.msra.mxu0 0.0
    %412 = vmatpush.msra.mxu0 %v399
    %413 = vmatpush.msra.mxu0 %v398
    %414 = vmatpush.msra.mxu0 %v397
    %415 = vmatpush.msra.mxu0 %v396
    %416 = vmatpush.msra.mxu0 %v395
    %417 = vmatpush.msra.mxu0 %v394
    %418 = vmatpush.msra.mxu0 %v393
    %419 = vmatpush.msra.mxu0 %v392
    %420 = vmatmul.f32.gmra.mxu0 %v402
    %v421 = vpop.f32.mrf.mxu0
    %v422 = vadd.f32 0.0, %v421
    %423 = vdwg.mxu0
    %v424 = vld [vmem:[#allocation6] sm:$0xff]
    %v425 = vld [vmem:[#allocation6 + $0x8] sm:$0xff]
    %v426 = vld [vmem:[#allocation6 + $0x10] sm:$0xff]
    %v427 = vld [vmem:[#allocation6 + $0x18] sm:$0xff]
    %v428 = vld [vmem:[#allocation6 + $0x20] sm:$0xff]
    %v429 = vld [vmem:[#allocation6 + $0x28] sm:$0xff]
    %v430 = vld [vmem:[#allocation6 + $0x30] sm:$0xff]
    %v431 = vld [vmem:[#allocation6 + $0x38] sm:$0xff]
    %v432 = vld [vmem:[#allocation6 + $0x40] sm:$0xff]
    %v433 = vld [vmem:[#allocation6 + $0x48] sm:$0xff]
    %v434 = vld [vmem:[#allocation6 + $0x50] sm:$0xff]
    %v435 = vld [vmem:[#allocation6 + $0x58] sm:$0xff]
    %v436 = vld [vmem:[#allocation6 + $0x60] sm:$0xff]
    %v437 = vld [vmem:[#allocation6 + $0x68] sm:$0xff]
    %v438 = vld [vmem:[#allocation6 + $0x70] sm:$0xff]
    %v439 = vld [vmem:[#allocation6 + $0x78] sm:$0xff]
    %v440 = vld [vmem:[#allocation9] sm:$0xff]
    %v441 = vld [vmem:[#allocation9 + $0x8] sm:$0xff]
    %v442 = vld [vmem:[#allocation9 + $0x10] sm:$0xff]
    %v443 = vld [vmem:[#allocation9 + $0x18] sm:$0xff]
    %v444 = vld [vmem:[#allocation9 + $0x20] sm:$0xff]
    %v445 = vld [vmem:[#allocation9 + $0x28] sm:$0xff]
    %v446 = vld [vmem:[#allocation9 + $0x30] sm:$0xff]
    %v447 = vld [vmem:[#allocation9 + $0x38] sm:$0xff]
    %v448 = vld [vmem:[#allocation9 + $0x40] sm:$0xff]
    %v449 = vld [vmem:[#allocation9 + $0x48] sm:$0xff]
    %v450 = vld [vmem:[#allocation9 + $0x50] sm:$0xff]
    %v451 = vld [vmem:[#allocation9 + $0x58] sm:$0xff]
    %v452 = vld [vmem:[#allocation9 + $0x60] sm:$0xff]
    %v453 = vld [vmem:[#allocation9 + $0x68] sm:$0xff]
    %v454 = vld [vmem:[#allocation9 + $0x70] sm:$0xff]
    %v455 = vld [vmem:[#allocation9 + $0x78] sm:$0xff]
    %v456 = vld [vmem:[#allocation9 + $0x80] sm:$0xff]
    %v457 = vld [vmem:[#allocation9 + $0x88] sm:$0xff]
    %v458 = vld [vmem:[#allocation9 + $0x90] sm:$0xff]
    %v459 = vld [vmem:[#allocation9 + $0x98] sm:$0xff]
    %v460 = vld [vmem:[#allocation9 + $0xa0] sm:$0xff]
    %v461 = vld [vmem:[#allocation9 + $0xa8] sm:$0xff]
    %v462 = vld [vmem:[#allocation9 + $0xb0] sm:$0xff]
    %v463 = vld [vmem:[#allocation9 + $0xb8] sm:$0xff]
    %v464 = vld [vmem:[#allocation9 + $0xc0] sm:$0xff]
    %v465 = vld [vmem:[#allocation9 + $0xc8] sm:$0xff]
    %v466 = vld [vmem:[#allocation9 + $0xd0] sm:$0xff]
    %v467 = vld [vmem:[#allocation9 + $0xd8] sm:$0xff]
    %v468 = vld [vmem:[#allocation9 + $0xe0] sm:$0xff]
    %v469 = vld [vmem:[#allocation9 + $0xe8] sm:$0xff]
    %v470 = vld [vmem:[#allocation9 + $0xf0] sm:$0xff]
    %v471 = vld [vmem:[#allocation9 + $0xf8] sm:$0xff]
    %472 = vmatpush.msra.mxu0 0.0
    %473 = vmatpush.msra.mxu0 0.0
    %474 = vmatpush.msra.mxu0 0.0
    %475 = vmatpush.msra.mxu0 0.0
    %476 = vmatpush.msra.mxu0 0.0
    %477 = vmatpush.msra.mxu0 0.0
    %478 = vmatpush.msra.mxu0 0.0
    %479 = vmatpush.msra.mxu0 0.0
    %480 = vmatpush.msra.mxu0 %v468
    %481 = vmatpush.msra.mxu0 %v464
    %482 = vmatpush.msra.mxu0 %v460
    %483 = vmatpush.msra.mxu0 %v456
    %484 = vmatpush.msra.mxu0 %v452
    %485 = vmatpush.msra.mxu0 %v448
    %486 = vmatpush.msra.mxu0 %v444
    %487 = vmatpush.msra.mxu0 %v440
    %488 = vmatmul.f32.gmra.mxu0 %v402
    %v489 = vpop.f32.mrf.mxu0
    %v490 = vadd.f32 0.0, %v489
    %491 = vdwg.mxu0
    %492 = vmatpush.msra.mxu0 0.0
    %493 = vmatpush.msra.mxu0 0.0
    %494 = vmatpush.msra.mxu0 0.0
    %495 = vmatpush.msra.mxu0 0.0
    %496 = vmatpush.msra.mxu0 0.0
    %497 = vmatpush.msra.mxu0 0.0
    %498 = vmatpush.msra.mxu0 0.0
    %499 = vmatpush.msra.mxu0 0.0
    %500 = vmatpush.msra.mxu0 %v469
    %501 = vmatpush.msra.mxu0 %v465
    %502 = vmatpush.msra.mxu0 %v461
    %503 = vmatpush.msra.mxu0 %v457
    %504 = vmatpush.msra.mxu0 %v453
    %505 = vmatpush.msra.mxu0 %v449
    %506 = vmatpush.msra.mxu0 %v445
    %507 = vmatpush.msra.mxu0 %v441
    %508 = vmatmul.f32.gmra.mxu0 %v402
    %v509 = vpop.f32.mrf.mxu0
    %v510 = vadd.f32 0.0, %v509
    %511 = vdwg.mxu0
    %512 = vmatpush.msra.mxu0 0.0
    %513 = vmatpush.msra.mxu0 0.0
    %514 = vmatpush.msra.mxu0 0.0
    %515 = vmatpush.msra.mxu0 0.0
    %516 = vmatpush.msra.mxu0 0.0
    %517 = vmatpush.msra.mxu0 0.0
    %518 = vmatpush.msra.mxu0 0.0
    %519 = vmatpush.msra.mxu0 0.0
    %520 = vmatpush.msra.mxu0 %v470
    %521 = vmatpush.msra.mxu0 %v466
    %522 = vmatpush.msra.mxu0 %v462
    %523 = vmatpush.msra.mxu0 %v458
    %524 = vmatpush.msra.mxu0 %v454
    %525 = vmatpush.msra.mxu0 %v450
    %526 = vmatpush.msra.mxu0 %v446
    %527 = vmatpush.msra.mxu0 %v442
    %528 = vmatmul.f32.gmra.mxu0 %v402
    %v529 = vpop.f32.mrf.mxu0
    %v530 = vadd.f32 0.0, %v529
    %531 = vdwg.mxu0
    %532 = vmatpush.msra.mxu0 0.0
    %533 = vmatpush.msra.mxu0 0.0
    %534 = vmatpush.msra.mxu0 0.0
    %535 = vmatpush.msra.mxu0 0.0
    %536 = vmatpush.msra.mxu0 0.0
    %537 = vmatpush.msra.mxu0 0.0
    %538 = vmatpush.msra.mxu0 0.0
    %539 = vmatpush.msra.mxu0 0.0
    %540 = vmatpush.msra.mxu0 %v471
    %541 = vmatpush.msra.mxu0 %v467
    %542 = vmatpush.msra.mxu0 %v463
    %543 = vmatpush.msra.mxu0 %v459
    %544 = vmatpush.msra.mxu0 %v455
    %545 = vmatpush.msra.mxu0 %v451
    %546 = vmatpush.msra.mxu0 %v447
    %547 = vmatpush.msra.mxu0 %v443
    %548 = vmatmul.f32.gmra.mxu0 %v402
    %v549 = vpop.f32.mrf.mxu0
    %v550 = vadd.f32 0.0, %v549
    %551 = vdwg.mxu0
    %vm552 = vcmask 261120
    %v554 = vsel %vm552, %v390, 0
    %556 = vmatpush.msra.mxu0 0.0
    %557 = vmatpush.msra.mxu0 0.0
    %558 = vmatpush.msra.mxu0 0.0
    %559 = vmatpush.msra.mxu0 0.0
    %560 = vmatpush.msra.mxu0 0.0
    %561 = vmatpush.msra.mxu0 0.0
    %562 = vmatpush.msra.mxu0 0.0
    %563 = vmatpush.msra.mxu0 0.0
    %564 = vmatpush.msra.mxu0 0.0
    %565 = vmatpush.msra.mxu0 0.0
    %566 = vmatpush.msra.mxu0 0.0
    %567 = vmatpush.msra.mxu0 0.0
    %568 = vmatpush.msra.mxu0 %v436
    %569 = vmatpush.msra.mxu0 %v432
    %570 = vmatpush.msra.mxu0 %v428
    %571 = vmatpush.msra.mxu0 %v424
    %572 = vmatmul.f32.gmra.mxu0 %v554
    %v573 = vpop.f32.mrf.mxu0
    %v574 = vadd.f32 %v490, %v573
    %575 = vdwg.mxu0
    %576 = vmatpush.msra.mxu0 0.0
    %577 = vmatpush.msra.mxu0 0.0
    %578 = vmatpush.msra.mxu0 0.0
    %579 = vmatpush.msra.mxu0 0.0
    %580 = vmatpush.msra.mxu0 0.0
    %581 = vmatpush.msra.mxu0 0.0
    %582 = vmatpush.msra.mxu0 0.0
    %583 = vmatpush.msra.mxu0 0.0
    %584 = vmatpush.msra.mxu0 0.0
    %585 = vmatpush.msra.mxu0 0.0
    %586 = vmatpush.msra.mxu0 0.0
    %587 = vmatpush.msra.mxu0 0.0
    %588 = vmatpush.msra.mxu0 %v437
    %589 = vmatpush.msra.mxu0 %v433
    %590 = vmatpush.msra.mxu0 %v429
    %591 = vmatpush.msra.mxu0 %v425
    %592 = vmatmul.f32.gmra.mxu0 %v554
    %v593 = vpop.f32.mrf.mxu0
    %v594 = vadd.f32 %v510, %v593
    %595 = vdwg.mxu0
    %596 = vmatpush.msra.mxu0 0.0
    %597 = vmatpush.msra.mxu0 0.0
    %598 = vmatpush.msra.mxu0 0.0
    %599 = vmatpush.msra.mxu0 0.0
    %600 = vmatpush.msra.mxu0 0.0
    %601 = vmatpush.msra.mxu0 0.0
    %602 = vmatpush.msra.mxu0 0.0
    %603 = vmatpush.msra.mxu0 0.0
    %604 = vmatpush.msra.mxu0 0.0
    %605 = vmatpush.msra.mxu0 0.0
    %606 = vmatpush.msra.mxu0 0.0
    %607 = vmatpush.msra.mxu0 0.0
    %608 = vmatpush.msra.mxu0 %v438
    %609 = vmatpush.msra.mxu0 %v434
    %610 = vmatpush.msra.mxu0 %v430
    %611 = vmatpush.msra.mxu0 %v426
    %612 = vmatmul.f32.gmra.mxu0 %v554
    %v613 = vpop.f32.mrf.mxu0
    %v614 = vadd.f32 %v530, %v613
    %615 = vdwg.mxu0
    %616 = vmatpush.msra.mxu0 0.0
    %617 = vmatpush.msra.mxu0 0.0
    %618 = vmatpush.msra.mxu0 0.0
    %619 = vmatpush.msra.mxu0 0.0
    %620 = vmatpush.msra.mxu0 0.0
    %621 = vmatpush.msra.mxu0 0.0
    %622 = vmatpush.msra.mxu0 0.0
    %623 = vmatpush.msra.mxu0 0.0
    %624 = vmatpush.msra.mxu0 0.0
    %625 = vmatpush.msra.mxu0 0.0
    %626 = vmatpush.msra.mxu0 0.0
    %627 = vmatpush.msra.mxu0 0.0
    %628 = vmatpush.msra.mxu0 %v439
    %629 = vmatpush.msra.mxu0 %v435
    %630 = vmatpush.msra.mxu0 %v431
    %631 = vmatpush.msra.mxu0 %v427
    %632 = vmatmul.f32.gmra.mxu0 %v554
    %v633 = vpop.f32.mrf.mxu0
    %v634 = vadd.f32 %v550, %v633
    %635 = vdwg.mxu0
    %v636 = vxor.u32 %v574, 2147483648
    %v637 = vmul.f32 %v636, 1.442695
    %v638 = vpow.pop %v637
    %v639 = vadd.f32 %v638, 1.0
    %v640 = vrcp.pop %v639
    %v641 = vmul.f32 %v639, %v640
    %v642 = vsub.f32 1.0, %v641
    %v643 = vmul.f32 %v640, %v642
    %v644 = vadd.f32 %v640, %v643
    %vm645 = vweird.f32 %v639
    %vm646 = vweird.f32 %v640
    %vm647 = vmor %vm645, %vm646
    %v648 = vsel %vm647, %v640, %v644
    %v649 = vand.u32 2147483647, %v639
    %vm650 = vcmp.eq.f32.partialorder %v649, 8.507059e+37
    %v651 = vand.u32 %v639, 2147483648
    %v652 = vor.u32 1.1754944e-38, %v651
    %v653 = vsel %vm650, %v652, %v648
    %v654 = vmul.f32 1.0, %v653
    %v655 = vxor.u32 %v594, 2147483648
    %v656 = vmul.f32 %v655, 1.442695
    %v657 = vpow.pop %v656
    %v658 = vadd.f32 %v657, 1.0
    %v659 = vrcp.pop %v658
    %v660 = vmul.f32 %v658, %v659
    %v661 = vsub.f32 1.0, %v660
    %v662 = vmul.f32 %v659, %v661
    %v663 = vadd.f32 %v659, %v662
    %vm664 = vweird.f32 %v658
    %vm665 = vweird.f32 %v659
    %vm666 = vmor %vm664, %vm665
    %v667 = vsel %vm666, %v659, %v663
    %v668 = vand.u32 2147483647, %v658
    %vm669 = vcmp.eq.f32.partialorder %v668, 8.507059e+37
    %v670 = vand.u32 %v658, 2147483648
    %v671 = vor.u32 1.1754944e-38, %v670
    %v672 = vsel %vm669, %v671, %v667
    %v673 = vmul.f32 1.0, %v672
    %v674 = vtanh.pop %v614
    %v675 = vxor.u32 %v634, 2147483648
    %v676 = vmul.f32 %v675, 1.442695
    %v677 = vpow.pop %v676
    %v678 = vadd.f32 %v677, 1.0
    %v679 = vrcp.pop %v678
    %v680 = vmul.f32 %v678, %v679
    %v681 = vsub.f32 1.0, %v680
    %v682 = vmul.f32 %v679, %v681
    %v683 = vadd.f32 %v679, %v682
    %vm684 = vweird.f32 %v678
    %vm685 = vweird.f32 %v679
    %vm686 = vmor %vm684, %vm685
    %v687 = vsel %vm686, %v679, %v683
    %v688 = vand.u32 2147483647, %v678
    %vm689 = vcmp.eq.f32.partialorder %v688, 8.507059e+37
    %v690 = vand.u32 %v678, 2147483648
    %v691 = vor.u32 1.1754944e-38, %v690
    %v692 = vsel %vm689, %v691, %v687
    %v693 = vmul.f32 1.0, %v692
    %v694 = vmul.f32 %v673, %v422
    %v695 = vmul.f32 %v654, %v674
    %v696 = vadd.f32 %v694, %v695
    %v697 = vtanh.pop %v696
    %v698 = vmul.f32 %v693, %v697
    %699 = vst [vmem:[#allocation11] sm:$0xff] %v698
    // Predicated region
    $region270: #{tpu_custom_call.1} parent=1 // pred_check
      _
    $region271: #{tpu_custom_call.1} parent=1 // pred_check_branch
      %701 = sbr.rel (0) target = $region273
    $region272: #{tpu_custom_call.1} parent=1 // pred_region
      %703 = vsyncadd [#allocation8], 0
      %s705 = sshll.u32 [#allocation11], 4
      %s706 = int_to_ptr.vmem [resolvable:$true] %s705
      %s707 = sshll.u32 %s7, 4
      %s708 = int_to_ptr.hbm [resolvable:$true] %s707
      %710 = dma.vmem_to_hbm [thread:$0]  %s706, 128, %s708, [#allocation8]
    $region273: #{tpu_custom_call.1} parent=1 // pred_fallthru
      _
    // Predicated region
    $region274: #{tpu_custom_call.1} parent=1 // pred_check
      _
    $region275: #{tpu_custom_call.1} parent=1 // pred_check_branch
      %712 = sbr.rel (0) target = $region277
    $region276: #{tpu_custom_call.1} parent=1 // pred_region
      %714 = dma.done [#allocation8], 128
    $region277: #{tpu_custom_call.1} parent=1 // pred_fallthru
      _
    %715 = vsyncpa [#allocation7], 1
    %716 = vsyncpa [#allocation10], 1
    %717 = vsyncpa [#allocation8], 1
  %718 = vsyncmov [#allocation3]
  %s719 = vpop.sfrf %718
  %p720 = scmp.eq.s32.totalorder %s719, 0
  %p721 = pneg %p720
  %723 = shalt.err (%p721)
  %s724 = scalar_lea.sflag [#allocation3], 1
  %725 = vsyncmov %s724
  %s726 = vpop.sfrf %725
  %p727 = scmp.eq.s32.totalorder %s726, 0
  %p728 = pneg %p727
  %730 = shalt.err (%p728)
  %s731 = scalar_lea.sflag [#allocation3], 2
  %732 = vsyncmov %s731
  %s733 = vpop.sfrf %732
  %p734 = scmp.eq.s32.totalorder %s733, 0
  %p735 = pneg %p734
  %737 = shalt.err (%p735)
  %s738 = scalar_lea.sflag [#allocation3], 3
  %739 = vsyncmov %s738
  %s740 = vpop.sfrf %739
  %p741 = scmp.eq.s32.totalorder %s740, 0
  %p742 = pneg %p741
  %744 = shalt.err (%p742)
  %s745 = scalar_lea.sflag [#allocation3], 4
  %746 = vsyncmov %s745
  %s747 = vpop.sfrf %746
  %p748 = scmp.eq.s32.totalorder %s747, 0
  %p749 = pneg %p748
  %751 = shalt.err (%p749)
  %s752 = scalar_lea.sflag [#allocation3], 5
  %753 = vsyncmov %s752
  %s754 = vpop.sfrf %753
  %p755 = scmp.eq.s32.totalorder %s754, 0
  %p756 = pneg %p755
  %758 = shalt.err (%p756)
  %s759 = scalar_lea.sflag [#allocation3], 6
  %760 = vsyncmov %s759
  %s761 = vpop.sfrf %760
  %p762 = scmp.eq.s32.totalorder %s761, 0
  %p763 = pneg %p762
  %765 = shalt.err (%p763)
  %s766 = scalar_lea.sflag [#allocation3], 7
  %767 = vsyncmov %s766
  %s768 = vpop.sfrf %767
  %p769 = scmp.eq.s32.totalorder %s768, 0
  %p770 = pneg %p769
  %772 = shalt.err (%p770)

</llo_original>
